<compile_context>
chip_gen: v7x
topology: tpu7x:2x2x1
jax: 0.10.0
libtpu: 0.0.40
codegen_flags: <defaults>
</compile_context>

<pallas_src>
import jax
import jax.numpy as jnp
from jax.experimental import pallas as pl
from jax.experimental.pallas import tpu as pltpu


def _round_up(x, m):
    return (x + m - 1) // m * m


# ---------------------------------------------------------------------------
# Kernel: one (scale, batch-tile) grid step of an ENet head
#   y = features @ W + b        (W stored as (feat, out) == torch weight.T)
# ---------------------------------------------------------------------------
def enet_kernel(f_ref, w_ref, b_ref, o_ref):
    # bf16 operands -> MXU, f32 accumulate; bias add + cast on the VPU in f32.
    acc = jnp.dot(f_ref[...], w_ref[...], preferred_element_type=jnp.float32)
    o_ref[...] = (acc + b_ref[...]).astype(o_ref.dtype)


def _choose_tile_b(B, feat_pad, out_pad, *, budget_bytes=32 << 20, max_tile=512):
    """Largest batch tile fitting the VMEM budget, MXU/sublane aligned.

    Budget = 2x bf16 x-tile + 2x f32 out-tile + (conservatively double-buffered)
    resident weights/bias + slack, so the choice is safe on v7x's 64 MiB VMEM too.
    """
    per_row = 2 * feat_pad * 2 + 2 * out_pad * 4                      # x (bf16) + out (f32), x2 buffers
    resident = 2 * (feat_pad * out_pad * 2 + out_pad * 4) + (1 << 20)  # W + b (+slack)
    tile = max((budget_bytes - resident) // per_row, 16)
    tile = int(min(tile, max_tile, _round_up(B, 16)))
    if B > 128:
        # Keep at least 2 batch tiles so the parallel grid shards across TCs (v7x megacore).
        tile = min(tile, _round_up(pl.cdiv(B, 2), 128))
    align = 128 if tile >= 128 else 16      # fill the MXU M-dim; 16 = bf16 sublane pack
    return max(align, tile // align * align)


def lfnet_enet_heads(features, weights, biases):
    """Per-scale ENet heads of LFNet in one pallas_call.

    features: (num_scales, B, feat_dim) f32  -- FNet (VGG19) outputs per scale
    weights : (num_scales, feat_dim, out_f)  -- out_f = num_attributes (*2 if augmented)
    biases  : (num_scales, out_f)
    returns : list of (B, out_f) f32 arrays, one per scale (matches LFNet.forward).
    """
    S, B, feat = features.shape
    out_f = weights.shape[-1]

    feat_pad = _round_up(feat, 128)     # fill K lanes of the MXU (zero pad is exact)
    out_pad = _round_up(out_f, 128)     # lane-dense output stores (no vst.msk)
    tile_b = _choose_tile_b(B, feat_pad, out_pad)
    B_pad = _round_up(B, tile_b)        # no ragged last tile

    f_p = jnp.zeros((S, B_pad, feat_pad), jnp.bfloat16).at[:, :B, :feat].set(
        features.astype(jnp.bfloat16))
    w_p = jnp.zeros((S, feat_pad, out_pad), jnp.bfloat16).at[:, :feat, :out_f].set(
        weights.astype(jnp.bfloat16))
    b_p = jnp.zeros((S, 1, out_pad), jnp.float32).at[:, 0, :out_f].set(
        biases.astype(jnp.float32))

    # Scale axis outer, batch axis inner: W/b index maps are invariant w.r.t. the inner
    # axis, so the per-scale weights stay resident across batch tiles.
    grid = (S, B_pad // tile_b)

    out = pl.pallas_call(
        enet_kernel,
        out_shape=jax.ShapeDtypeStruct((S, B_pad, out_pad), jnp.float32),
        grid_spec=pltpu.PrefetchScalarGridSpec(
            num_scalar_prefetch=0,
            grid=grid,
            in_specs=[
                pl.BlockSpec((None, tile_b, feat_pad), lambda s, i: (s, i, 0)),   # x tile
                pl.BlockSpec((None, feat_pad, out_pad), lambda s, i: (s, 0, 0)),  # W (per scale)
                pl.BlockSpec((None, 1, out_pad), lambda s, i: (s, 0, 0)),         # b (per scale)
            ],
            out_specs=pl.BlockSpec((None, tile_b, out_pad), lambda s, i: (s, i, 0)),
        ),
        compiler_params=pltpu.CompilerParams(
            dimension_semantics=("parallel", "parallel"),
            vmem_limit_bytes=48 << 20,   # above default scoped limits, below v7x's 64 MiB physical
        ),
    )(f_p, w_p, b_p)

    out = out[:, :B, :out_f]             # drop batch / lane padding
    return [out[s] for s in range(S)]    # LFNet returns a list of per-scale semantics


if __name__ == "__main__":
    key = jax.random.PRNGKey(0)
    k_f, k_w, k_b = jax.random.split(key, 3)

    # Small, module-consistent shapes: 4096 == VGG19 classifier[-3].out_features.
    num_scales, batch, feat_dim = 2, 2, 4096
    num_attributes, augmented = 16, False
    out_f = 2 * num_attributes if augmented else num_attributes

    # Stand-in for the per-scale FNet (VGG19) feature outputs.
    features = jax.random.normal(k_f, (num_scales, batch, feat_dim), jnp.float32)
    # ENet parameters, stored (feat, out) == torch weight.T, nn.Linear-like init scale.
    scale = 1.0 / jnp.sqrt(feat_dim)
    weights = jax.random.uniform(k_w, (num_scales, feat_dim, out_f), jnp.float32, -scale, scale)
    biases = jax.random.uniform(k_b, (num_scales, out_f), jnp.float32, -scale, scale)

    semantic_attributes = lfnet_enet_heads(features, weights, biases)
    jax.block_until_ready(semantic_attributes)

    # Reference check (same bf16-rounded operands, true-f32 math).
    ok = True
    for s in range(num_scales):
        f32 = features[s].astype(jnp.bfloat16).astype(jnp.float32)
        w32 = weights[s].astype(jnp.bfloat16).astype(jnp.float32)
        ref = jnp.dot(f32, w32, precision=jax.lax.Precision.HIGHEST) + biases[s]
        got = semantic_attributes[s]
        assert got.shape == (batch, out_f)
        ok = ok and bool(jnp.allclose(got, ref, atol=1e-3, rtol=1e-3))
    assert ok

    print("KERNEL_OK")
</pallas_src>

<mosaic_0001>
module attributes {stable_mosaic.version = 11 : i64} {
  func.func @enet_kernel(%arg0: i32, %arg1: i32, %arg2: memref<1x16x4096xbf16, #tpu.memory_space<vmem>>, %arg3: memref<1x4096x128xbf16, #tpu.memory_space<vmem>>, %arg4: memref<1x1x128xf32, #tpu.memory_space<vmem>>, %arg5: memref<1x16x128xf32, #tpu.memory_space<vmem>>) attributes {dimension_semantics = [#tpu.dimension_semantics<parallel>, #tpu.dimension_semantics<parallel>], iteration_bounds = array<i64: 2, 1>, scalar_prefetch = 0 : i64, scratch_operands = 0 : i64, tpu.core_type = #tpu.core_type<tc>, window_params = [{transform_indices = @transform_0, window_bounds = array<i64: 1, 16, 4096>}, {transform_indices = @transform_1, window_bounds = array<i64: 1, 4096, 128>}, {transform_indices = @transform_2, window_bounds = array<i64: 1, 1, 128>}, {transform_indices = @transform_3, window_bounds = array<i64: 1, 16, 128>}]} {
    %c0 = arith.constant 0 : index
    %c0_0 = arith.constant 0 : index
    %c0_1 = arith.constant 0 : index
    %0 = vector.load %arg2[%c0, %c0_0, %c0_1] : memref<1x16x4096xbf16, #tpu.memory_space<vmem>>, vector<1x16x4096xbf16>
    %1 = vector.shape_cast %0 : vector<1x16x4096xbf16> to vector<16x4096xbf16>
    %c0_2 = arith.constant 0 : index
    %c0_3 = arith.constant 0 : index
    %c0_4 = arith.constant 0 : index
    %2 = vector.load %arg3[%c0_2, %c0_3, %c0_4] : memref<1x4096x128xbf16, #tpu.memory_space<vmem>>, vector<1x4096x128xbf16>
    %3 = vector.shape_cast %2 : vector<1x4096x128xbf16> to vector<4096x128xbf16>
    %cst = arith.constant dense<0.000000e+00> : vector<16x128xf32>
    %4 = tpu.matmul %1, %3, %cst {dimension_numbers = #tpu.dot_dimension_numbers<[1], [0], [0], [1], [0, 0, 1, 1], [], []>} : vector<16x4096xbf16>, vector<4096x128xbf16>, vector<16x128xf32> -> vector<16x128xf32>
    %c0_5 = arith.constant 0 : index
    %c0_6 = arith.constant 0 : index
    %c0_7 = arith.constant 0 : index
    %5 = vector.load %arg4[%c0_5, %c0_6, %c0_7] : memref<1x1x128xf32, #tpu.memory_space<vmem>>, vector<1x1x128xf32>
    %6 = vector.shape_cast %5 : vector<1x1x128xf32> to vector<1x128xf32>
    %7 = vector.broadcast %6 : vector<1x128xf32> to vector<16x128xf32>
    %8 = arith.addf %4, %7 : vector<16x128xf32>
    %c0_8 = arith.constant 0 : index
    %c0_9 = arith.constant 0 : index
    %c0_10 = arith.constant 0 : index
    %9 = vector.load %arg5[%c0_8, %c0_9, %c0_10] : memref<1x16x128xf32, #tpu.memory_space<vmem>>, vector<1x16x128xf32>
    %10 = vector.shape_cast %9 : vector<1x16x128xf32> to vector<16x128xf32>
    %11 = vector.shape_cast %8 : vector<16x128xf32> to vector<1x16x128xf32>
    tpu.vector_store %arg5[%c0_8, %c0_9, %c0_10], %11 {strides = array<i32>} : memref<1x16x128xf32, #tpu.memory_space<vmem>>, vector<1x16x128xf32>,
    return
  }
  func.func @transform_0(%arg0: i32, %arg1: i32) -> (i32, i32, i32) {
    %c0_i32 = arith.constant 0 : i32
    %c0_i32_0 = arith.constant 0 : i32
    return %arg0, %arg1, %c0_i32 : i32, i32, i32
  }
  func.func @transform_1(%arg0: i32, %arg1: i32) -> (i32, i32, i32) {
    %c0_i32 = arith.constant 0 : i32
    %c0_i32_0 = arith.constant 0 : i32
    %c0_i32_1 = arith.constant 0 : i32
    return %arg0, %c0_i32, %c0_i32_0 : i32, i32, i32
  }
  func.func @transform_2(%arg0: i32, %arg1: i32) -> (i32, i32, i32) {
    %c0_i32 = arith.constant 0 : i32
    %c0_i32_0 = arith.constant 0 : i32
    %c0_i32_1 = arith.constant 0 : i32
    return %arg0, %c0_i32, %c0_i32_0 : i32, i32, i32
  }
  func.func @transform_3(%arg0: i32, %arg1: i32) -> (i32, i32, i32) {
    %c0_i32 = arith.constant 0 : i32
    %c0_i32_0 = arith.constant 0 : i32
    return %arg0, %arg1, %c0_i32 : i32, i32, i32
  }
}

</mosaic_0001>

<llo_original>
// kernel: tpu_custom_call.1
$region0: #{tpu_custom_call.1}
  #allocation0 [shape = 'u32[]', space=smem, size = 0x4, offset = 0x4, fixed_abs, tag = 'smem constant byte address 0x4 - core index']
  #allocation1 [shape = 'u32[144,128]{1,0:T(1,128)}', space=vmem, size = 0x12000, scoped, tag = 'internal scratch']
  %s0 = inlined_call_operand.hbm [shape: bf16[2,16,4096], index: 0, kind: input, shape index: {}]
  %s1 = inlined_call_operand.hbm [shape: bf16[2,4096,128], index: 1, kind: input, shape index: {}]
  %s2 = inlined_call_operand.hbm [shape: f32[2,1,128], index: 2, kind: input, shape index: {}]
  %s3 = inlined_call_operand.hbm [shape: f32[2,16,128], index: 3, kind: output, shape index: {}]
  %s4 = sld [smem:[#allocation0]]
  $region57: #{tpu_custom_call.1} parent=0
    _
  %s6 = ssub.s32 1, %s4
  %s7 = scalar_select 0, %s6, %s4
  $region1: #{tpu_custom_call.1} parent=0
    #allocation2 [shape = 'u8[262144]{0}', space=vmem, size = 0x40000, scoped, tag = 'input window, operand 0']
    #allocation3 [shape = 's32[2]{0}', space=sflag, size = 0x8, scoped, tag = 'scoped memory for tpu_custom_call.1']
    #allocation4 [shape = 's32[2]{0}', space=sflag, size = 0x8, scoped, tag = 'scoped memory for tpu_custom_call.1']
    #allocation5 [shape = 'u8[2097152]{0}', space=vmem, size = 0x200000, scoped, tag = 'input window, operand 1']
    #allocation6 [shape = 's32[2]{0}', space=sflag, size = 0x8, scoped, tag = 'scoped memory for tpu_custom_call.1']
    #allocation7 [shape = 'u8[1024]{0}', space=vmem, size = 0x400, scoped, tag = 'input window, operand 2']
    #allocation8 [shape = 'u8[16384]{0}', space=vmem, size = 0x4000, scoped, tag = 'output window, operand 0']
    %8 = vsyncpa [#allocation3], 0
    %s9 = scalar_lea.sflag [#allocation3], 1
    %10 = vsyncpa %s9, 0
    %11 = vsyncpa [#allocation6], 0
    %s12 = scalar_lea.sflag [#allocation6], 1
    %13 = vsyncpa %s12, 0
    %14 = vsyncpa [#allocation4], 0
    %s15 = scalar_lea.sflag [#allocation4], 1
    %16 = vsyncpa %s15, 0
    loop: start=0, step=1, limit=4
    $region2: #{tpu_custom_call.1} parent=1 // loop_pre_header
      _
    $region3: #{tpu_custom_call.1} parent=1 // loop_header
      %s18 = sphi 0, %s22
      %p19 = scmp.ge.s32.totalorder %s18, 4
      %s25 = sphi 0, %s37
      %s26 = sphi 0, %s33
      %s27 = sphi 0, %s25
      %s28 = sphi 0, %s26
      %s29 = sphi 0, %s27
      %s30 = sphi 0, %s28
      %s42 = sphi 0, %s44
      %s45 = sphi 0, %s42
      %s46 = sphi 0, %s45
      %s62 = sphi 0, %s46
      %s68 = sphi 0, %s70
      %s71 = sphi 0, %s68
      %s72 = sphi 0, %s71
      %s88 = sphi 0, %s72
      %s94 = sphi 0, %s96
      %s97 = sphi 0, %s94
      %s98 = sphi 0, %s97
      %s114 = sphi 0, %s98
      %s122 = sphi 0, %s124
      %s125 = sphi 0, %s122
      %s126 = sphi 0, %s125
      %s142 = sphi 0, %s126
    $region4: #{tpu_custom_call.1} parent=1 // loop_header_branch
      %21 = sbr.rel (%p19) target = $region8
    $region5: #{tpu_custom_call.1} parent=1 // loop_body
      %s23 = ssub.s32 %s18, 1
      %s24 = ssub.s32 %s18, 2
      %s31 = sadd.s32 1, %s26
      %p32 = scmp.ge.s32.totalorder %s31, 1
      %s33 = scalar_select %p32, 0, %s31
      %s34 = sadd.s32 1, %s25
      %s35 = scalar_select %p32, %s34, %s25
      %p36 = scmp.ge.s32.totalorder %s35, 2
      %s37 = scalar_select %p36, 0, %s35
      %s38 = ssub.s32 %s25, %s37
      %s39 = ssub.s32 %s26, %s33
      %s40 = sor.u32 %s38, %s39
      %p41 = scmp.eq.s32.totalorder %s40, 0
      %s43 = sadd.s32 %s42, 1
      %s44 = scalar_select %p41, %s42, %s43
      %p47 = pneg %p41
      %p48 = scmp.eq.s32.totalorder %s18, 1
      %p49 = por %p47, %p48
      %p50 = scmp.ne.s32.totalorder %s42, %s45
      %p51 = scmp.eq.s32.totalorder %s18, 0
      %p52 = por %p50, %p51
      %p53 = scmp.ne.s32.totalorder %s42, %s45
      %p54 = scmp.eq.s32.totalorder %s23, 1
      %p55 = por %p53, %p54
      %p56 = scmp.ne.s32.totalorder %s45, %s46
      %p57 = scmp.eq.s32.totalorder %s23, 0
      %p58 = por %p56, %p57
      %p59 = scmp.ne.s32.totalorder %s45, %s46
      %p60 = scmp.eq.s32.totalorder %s24, 1
      %p61 = por %p59, %p60
      %p63 = scmp.ne.s32.totalorder %s46, %s62
      %p64 = scmp.eq.s32.totalorder %s24, 0
      %p65 = por %p63, %p64
      %s66 = ssub.s32 %s25, %s37
      %p67 = scmp.eq.s32.totalorder %s66, 0
      %s69 = sadd.s32 %s68, 1
      %s70 = scalar_select %p67, %s68, %s69
      %p73 = pneg %p67
      %p74 = scmp.eq.s32.totalorder %s18, 1
      %p75 = por %p73, %p74
      %p76 = scmp.ne.s32.totalorder %s68, %s71
      %p77 = scmp.eq.s32.totalorder %s18, 0
      %p78 = por %p76, %p77
      %p79 = scmp.ne.s32.totalorder %s68, %s71
      %p80 = scmp.eq.s32.totalorder %s23, 1
      %p81 = por %p79, %p80
      %p82 = scmp.ne.s32.totalorder %s71, %s72
      %p83 = scmp.eq.s32.totalorder %s23, 0
      %p84 = por %p82, %p83
      %p85 = scmp.ne.s32.totalorder %s71, %s72
      %p86 = scmp.eq.s32.totalorder %s24, 1
      %p87 = por %p85, %p86
      %p89 = scmp.ne.s32.totalorder %s72, %s88
      %p90 = scmp.eq.s32.totalorder %s24, 0
      %p91 = por %p89, %p90
      %s92 = ssub.s32 %s25, %s37
      %p93 = scmp.eq.s32.totalorder %s92, 0
      %s95 = sadd.s32 %s94, 1
      %s96 = scalar_select %p93, %s94, %s95
      %p99 = pneg %p93
      %p100 = scmp.eq.s32.totalorder %s18, 1
      %p101 = por %p99, %p100
      %p102 = scmp.ne.s32.totalorder %s94, %s97
      %p103 = scmp.eq.s32.totalorder %s18, 0
      %p104 = por %p102, %p103
      %p105 = scmp.ne.s32.totalorder %s94, %s97
      %p106 = scmp.eq.s32.totalorder %s23, 1
      %p107 = por %p105, %p106
      %p108 = scmp.ne.s32.totalorder %s97, %s98
      %p109 = scmp.eq.s32.totalorder %s23, 0
      %p110 = por %p108, %p109
      %p111 = scmp.ne.s32.totalorder %s97, %s98
      %p112 = scmp.eq.s32.totalorder %s24, 1
      %p113 = por %p111, %p112
      %p115 = scmp.ne.s32.totalorder %s98, %s114
      %p116 = scmp.eq.s32.totalorder %s24, 0
      %p117 = por %p115, %p116
      %s118 = ssub.s32 %s25, %s37
      %s119 = ssub.s32 %s26, %s33
      %s120 = sor.u32 %s118, %s119
      %p121 = scmp.eq.s32.totalorder %s120, 0
      %s123 = sadd.s32 %s122, 1
      %s124 = scalar_select %p121, %s122, %s123
      %p127 = pneg %p121
      %p128 = scmp.eq.s32.totalorder %s18, 1
      %p129 = por %p127, %p128
      %p130 = scmp.ne.s32.totalorder %s122, %s125
      %p131 = scmp.eq.s32.totalorder %s18, 0
      %p132 = por %p130, %p131
      %p133 = scmp.ne.s32.totalorder %s122, %s125
      %p134 = scmp.eq.s32.totalorder %s23, 1
      %p135 = por %p133, %p134
      %p136 = scmp.ne.s32.totalorder %s125, %s126
      %p137 = scmp.eq.s32.totalorder %s23, 0
      %p138 = por %p136, %p137
      %p139 = scmp.ne.s32.totalorder %s125, %s126
      %p140 = scmp.eq.s32.totalorder %s24, 1
      %p141 = por %p139, %p140
      %p143 = scmp.ne.s32.totalorder %s126, %s142
      %p144 = scmp.eq.s32.totalorder %s24, 0
      %p145 = por %p143, %p144
      %p146 = scmp.le.s32.totalorder 1, %s18
      %p147 = scmp.lt.s32.totalorder %s18, 3
      %p148 = pnand %p146, %p147
      %p149 = pneg %p148
      // Predicated region
      $region9: #{tpu_custom_call.1} parent=5 // pred_check
        _
      $region10: #{tpu_custom_call.1} parent=5 // pred_check_branch
        %151 = sbr.rel (%p148) target = $region12
      $region11: #{tpu_custom_call.1} parent=5 // pred_region
        %s152 = ssub.s32 %s18, 1
      $region12: #{tpu_custom_call.1} parent=5 // pred_fallthru
        _
      %p153 = scmp.lt.s32.totalorder %s18, 2
      // Predicated region
      $region13: #{tpu_custom_call.1} parent=5 // pred_check
        %p154 = pneg %p153
      $region14: #{tpu_custom_call.1} parent=5 // pred_check_branch
        %156 = sbr.rel (%p154) target = $region16
      $region15: #{tpu_custom_call.1} parent=5 // pred_region
        // Predicated region
        $region17: #{tpu_custom_call.1} parent=15 // pred_check
          %p157 = pneg %p52
        $region18: #{tpu_custom_call.1} parent=15 // pred_check_branch
          %159 = sbr.rel (%p157) target = $region20
        $region19: #{tpu_custom_call.1} parent=15 // pred_region
          %s160 = sand.u32 %s42, 1
          %s161 = scalar_lea.sflag [#allocation3], %s160
          %s162 = sand.u32 %s42, 1
          %s163 = smul.addr %s162, 256
          %s164 = scalar_lea.vmem [#allocation2], %s163
          %s165 = smul.u32 2, %s26
          %s167 = ssub.s32 4096, 4096
          %168 = vsyncadd %s161, %s167
          %s169 = smul.addr %s165, 32
          %s170 = smul.addr %s25, 64
          %s171 = sadd.s32 %s169, %s170
          %s172 = smul.addr %s171, 64
          %s173 = scalar_lea.hbm %s0, %s172
          %s174 = sshll.u32 %s164, 4
          %s175 = int_to_ptr.vmem [resolvable:$true] %s174
          %180 = dma.hbm_to_vmem [thread:$0]  %s173, 4096, %s175, %s161, 2048, 2048, 128
        $region20: #{tpu_custom_call.1} parent=15 // pred_fallthru
          _
        // Predicated region
        $region21: #{tpu_custom_call.1} parent=15 // pred_check
          %p181 = pneg %p78
        $region22: #{tpu_custom_call.1} parent=15 // pred_check_branch
          %183 = sbr.rel (%p181) target = $region24
        $region23: #{tpu_custom_call.1} parent=15 // pred_region
          %s184 = sand.u32 %s18, 1
          %s185 = scalar_lea.sflag [#allocation6], %s184
          %s186 = sand.u32 %s68, 1
          %s187 = smul.addr %s186, 2048
          %s188 = scalar_lea.vmem [#allocation5], %s187
          %s190 = ssub.s32 32768, 32768
          %191 = vsyncadd %s185, %s190
          %s192 = smul.addr %s25, 512
          %s193 = smul.addr %s192, 64
          %s194 = scalar_lea.hbm %s1, %s193
          %s195 = sshll.u32 %s188, 4
          %s196 = int_to_ptr.vmem [resolvable:$true] %s195
          %201 = dma.hbm_to_vmem [thread:$0]  %s194, 32768, %s196, %s185, 64, 64, 4
        $region24: #{tpu_custom_call.1} parent=15 // pred_fallthru
          _
        // Predicated region
        $region25: #{tpu_custom_call.1} parent=15 // pred_check
          %p202 = pneg %p104
        $region26: #{tpu_custom_call.1} parent=15 // pred_check_branch
          %204 = sbr.rel (%p202) target = $region28
        $region27: #{tpu_custom_call.1} parent=15 // pred_region
          %s205 = sand.u32 %s18, 1
          %s206 = scalar_lea.sflag [#allocation6], %s205
          %s207 = sand.u32 %s94, 1
          %s208 = scalar_lea.vmem [#allocation7], %s207
          %s210 = ssub.s32 16, 16
          %211 = vsyncadd %s206, %s210
          %s212 = smul.addr %s25, 16
          %s213 = scalar_lea.hbm %s2, %s212
          %s215 = sshll.u32 %s208, 4
          %s216 = int_to_ptr.vmem [resolvable:$true] %s215
          %218 = dma.hbm_to_vmem [thread:$0]  %s213, 16, %s216, %s206
        $region28: #{tpu_custom_call.1} parent=15 // pred_fallthru
          _
      $region16: #{tpu_custom_call.1} parent=5 // pred_fallthru
        _
      %p219 = scmp.le.s32.totalorder 1, %s18
      %p220 = scmp.lt.s32.totalorder %s18, 3
      %p221 = pnand %p219, %p220
      %p222 = pneg %p221
      // Predicated region
      $region29: #{tpu_custom_call.1} parent=5 // pred_check
        _
      $region30: #{tpu_custom_call.1} parent=5 // pred_check_branch
        %224 = sbr.rel (%p221) target = $region32
      $region31: #{tpu_custom_call.1} parent=5 // pred_region
        %s225 = ssub.s32 %s18, 1
        %s226 = sand.u32 %s45, 1
        %s227 = scalar_lea.sflag [#allocation3], %s226
        %s228 = sand.u32 %s45, 1
        %s229 = smul.addr %s228, 256
        %s230 = scalar_lea.vmem [#allocation2], %s229
        // Predicated region
        $region33: #{tpu_custom_call.1} parent=31 // pred_check
          %p231 = pneg %p58
        $region34: #{tpu_custom_call.1} parent=31 // pred_check_branch
          %233 = sbr.rel (%p231) target = $region36
        $region35: #{tpu_custom_call.1} parent=31 // pred_region
          %234 = dma.done %s227, 4096
        $region36: #{tpu_custom_call.1} parent=31 // pred_fallthru
          _
        %s235 = sand.u32 %s23, 1
        %s236 = scalar_lea.sflag [#allocation6], %s235
        %s237 = sand.u32 %s71, 1
        %s238 = smul.addr %s237, 2048
        %s239 = scalar_lea.vmem [#allocation5], %s238
        // Predicated region
        $region37: #{tpu_custom_call.1} parent=31 // pred_check
          %p240 = pneg %p84
        $region38: #{tpu_custom_call.1} parent=31 // pred_check_branch
          %242 = sbr.rel (%p240) target = $region40
        $region39: #{tpu_custom_call.1} parent=31 // pred_region
          %243 = dma.done %s236, 32768
        $region40: #{tpu_custom_call.1} parent=31 // pred_fallthru
          _
        %s244 = sand.u32 %s23, 1
        %s245 = scalar_lea.sflag [#allocation6], %s244
        %s246 = sand.u32 %s97, 1
        %s247 = scalar_lea.vmem [#allocation7], %s246
        // Predicated region
        $region41: #{tpu_custom_call.1} parent=31 // pred_check
          %p248 = pneg %p110
        $region42: #{tpu_custom_call.1} parent=31 // pred_check_branch
          %250 = sbr.rel (%p248) target = $region44
        $region43: #{tpu_custom_call.1} parent=31 // pred_region
          %251 = dma.done %s245, 16
        $region44: #{tpu_custom_call.1} parent=31 // pred_fallthru
          _
        %s252 = sand.u32 %s45, 1
        %s253 = scalar_lea.sflag [#allocation3], %s252
        %s254 = sand.u32 %s45, 1
        %s255 = smul.addr %s254, 256
        %s256 = scalar_lea.vmem [#allocation2], %s255
        %p257 = pneg %p58
        %p258 = pneg %p55
        %s259 = sand.u32 %s23, 1
        %s260 = scalar_lea.sflag [#allocation6], %s259
        %s261 = sand.u32 %s71, 1
        %s262 = smul.addr %s261, 2048
        %s263 = scalar_lea.vmem [#allocation5], %s262
        %p264 = pneg %p84
        %p265 = pneg %p81
        %s266 = sand.u32 %s23, 1
        %s267 = scalar_lea.sflag [#allocation6], %s266
        %s268 = sand.u32 %s97, 1
        %s269 = scalar_lea.vmem [#allocation7], %s268
        %p270 = pneg %p110
        %p271 = pneg %p107
        %p272 = pneg %p138
        %p273 = pneg %p135
        %s274 = sand.u32 %s125, 1
        %s275 = scalar_lea.sflag [#allocation4], %s274
        %s276 = sand.u32 %s125, 1
        %s277 = smul.addr %s276, 16
        %s278 = scalar_lea.vmem [#allocation8], %s277
        %s279 = smul.u32 2, %s28
        %s280 = smul.u32 2, %s28
        %v282 = vld [vmem:[%s230] sm:$0xff]
        %v283 = vld [vmem:[%s230 + $0x8] sm:$0xff]
        %v284 = vld [vmem:[%s230 + $0x10] sm:$0xff]
        %v285 = vld [vmem:[%s230 + $0x18] sm:$0xff]
        %v286 = vld [vmem:[%s230 + $0x20] sm:$0xff]
        %v287 = vld [vmem:[%s230 + $0x28] sm:$0xff]
        %v288 = vld [vmem:[%s230 + $0x30] sm:$0xff]
        %v289 = vld [vmem:[%s230 + $0x38] sm:$0xff]
        %v290 = vld [vmem:[%s230 + $0x40] sm:$0xff]
        %v291 = vld [vmem:[%s230 + $0x48] sm:$0xff]
        %v292 = vld [vmem:[%s230 + $0x50] sm:$0xff]
        %v293 = vld [vmem:[%s230 + $0x58] sm:$0xff]
        %v294 = vld [vmem:[%s230 + $0x60] sm:$0xff]
        %v295 = vld [vmem:[%s230 + $0x68] sm:$0xff]
        %v296 = vld [vmem:[%s230 + $0x70] sm:$0xff]
        %v297 = vld [vmem:[%s230 + $0x78] sm:$0xff]
        %v298 = vld [vmem:[%s230 + $0x80] sm:$0xff]
        %v299 = vld [vmem:[%s230 + $0x88] sm:$0xff]
        %v300 = vld [vmem:[%s230 + $0x90] sm:$0xff]
        %v301 = vld [vmem:[%s230 + $0x98] sm:$0xff]
        %v302 = vld [vmem:[%s230 + $0xa0] sm:$0xff]
        %v303 = vld [vmem:[%s230 + $0xa8] sm:$0xff]
        %v304 = vld [vmem:[%s230 + $0xb0] sm:$0xff]
        %v305 = vld [vmem:[%s230 + $0xb8] sm:$0xff]
        %v306 = vld [vmem:[%s230 + $0xc0] sm:$0xff]
        %v307 = vld [vmem:[%s230 + $0xc8] sm:$0xff]
        %v308 = vld [vmem:[%s230 + $0xd0] sm:$0xff]
        %v309 = vld [vmem:[%s230 + $0xd8] sm:$0xff]
        %v310 = vld [vmem:[%s230 + $0xe0] sm:$0xff]
        %v311 = vld [vmem:[%s230 + $0xe8] sm:$0xff]
        %v312 = vld [vmem:[%s230 + $0xf0] sm:$0xff]
        %v313 = vld [vmem:[%s230 + $0xf8] sm:$0xff]
        %v314 = vld [vmem:[%s239] sm:$0xf]
        %v315 = vld [vmem:[%s239 + $0x4] sm:$0xf]
        %v316 = vld [vmem:[%s239 + $0x8] sm:$0xf]
        %v317 = vld [vmem:[%s239 + $0xc] sm:$0xf]
        %v318 = vld [vmem:[%s239 + $0x10] sm:$0xf]
        %v319 = vld [vmem:[%s239 + $0x14] sm:$0xf]
        %v320 = vld [vmem:[%s239 + $0x18] sm:$0xf]
        %v321 = vld [vmem:[%s239 + $0x1c] sm:$0xf]
        %v322 = vld [vmem:[%s239 + $0x20] sm:$0xf]
        %v323 = vld [vmem:[%s239 + $0x24] sm:$0xf]
        %v324 = vld [vmem:[%s239 + $0x28] sm:$0xf]
        %v325 = vld [vmem:[%s239 + $0x2c] sm:$0xf]
        %v326 = vld [vmem:[%s239 + $0x30] sm:$0xf]
        %v327 = vld [vmem:[%s239 + $0x34] sm:$0xf]
        %v328 = vld [vmem:[%s239 + $0x38] sm:$0xf]
        %v329 = vld [vmem:[%s239 + $0x3c] sm:$0xf]
        %v330 = vld [vmem:[%s239 + $0x40] sm:$0xf]
        %v331 = vld [vmem:[%s239 + $0x44] sm:$0xf]
        %v332 = vld [vmem:[%s239 + $0x48] sm:$0xf]
        %v333 = vld [vmem:[%s239 + $0x4c] sm:$0xf]
        %v334 = vld [vmem:[%s239 + $0x50] sm:$0xf]
        %v335 = vld [vmem:[%s239 + $0x54] sm:$0xf]
        %v336 = vld [vmem:[%s239 + $0x58] sm:$0xf]
        %v337 = vld [vmem:[%s239 + $0x5c] sm:$0xf]
        %v338 = vld [vmem:[%s239 + $0x60] sm:$0xf]
        %v339 = vld [vmem:[%s239 + $0x64] sm:$0xf]
        %v340 = vld [vmem:[%s239 + $0x68] sm:$0xf]
        %v341 = vld [vmem:[%s239 + $0x6c] sm:$0xf]
        %v342 = vld [vmem:[%s239 + $0x70] sm:$0xf]
        %v343 = vld [vmem:[%s239 + $0x74] sm:$0xf]
        %v344 = vld [vmem:[%s239 + $0x78] sm:$0xf]
        %v345 = vld [vmem:[%s239 + $0x7c] sm:$0xf]
        %v346 = vld [vmem:[%s239 + $0x80] sm:$0xf]
        %v347 = vld [vmem:[%s239 + $0x84] sm:$0xf]
        %v348 = vld [vmem:[%s239 + $0x88] sm:$0xf]
        %v349 = vld [vmem:[%s239 + $0x8c] sm:$0xf]
        %v350 = vld [vmem:[%s239 + $0x90] sm:$0xf]
        %v351 = vld [vmem:[%s239 + $0x94] sm:$0xf]
        %v352 = vld [vmem:[%s239 + $0x98] sm:$0xf]
        %v353 = vld [vmem:[%s239 + $0x9c] sm:$0xf]
        %v354 = vld [vmem:[%s239 + $0xa0] sm:$0xf]
        %v355 = vld [vmem:[%s239 + $0xa4] sm:$0xf]
        %v356 = vld [vmem:[%s239 + $0xa8] sm:$0xf]
        %v357 = vld [vmem:[%s239 + $0xac] sm:$0xf]
        %v358 = vld [vmem:[%s239 + $0xb0] sm:$0xf]
        %v359 = vld [vmem:[%s239 + $0xb4] sm:$0xf]
        %v360 = vld [vmem:[%s239 + $0xb8] sm:$0xf]
        %v361 = vld [vmem:[%s239 + $0xbc] sm:$0xf]
        %v362 = vld [vmem:[%s239 + $0xc0] sm:$0xf]
        %v363 = vld [vmem:[%s239 + $0xc4] sm:$0xf]
        %v364 = vld [vmem:[%s239 + $0xc8] sm:$0xf]
        %v365 = vld [vmem:[%s239 + $0xcc] sm:$0xf]
        %v366 = vld [vmem:[%s239 + $0xd0] sm:$0xf]
        %v367 = vld [vmem:[%s239 + $0xd4] sm:$0xf]
        %v368 = vld [vmem:[%s239 + $0xd8] sm:$0xf]
        %v369 = vld [vmem:[%s239 + $0xdc] sm:$0xf]
        %v370 = vld [vmem:[%s239 + $0xe0] sm:$0xf]
        %v371 = vld [vmem:[%s239 + $0xe4] sm:$0xf]
        %v372 = vld [vmem:[%s239 + $0xe8] sm:$0xf]
        %v373 = vld [vmem:[%s239 + $0xec] sm:$0xf]
        %v374 = vld [vmem:[%s239 + $0xf0] sm:$0xf]
        %v375 = vld [vmem:[%s239 + $0xf4] sm:$0xf]
        %v376 = vld [vmem:[%s239 + $0xf8] sm:$0xf]
        %v377 = vld [vmem:[%s239 + $0xfc] sm:$0xf]
        %v378 = vld [vmem:[%s239 + $0x100] sm:$0xf]
        %v379 = vld [vmem:[%s239 + $0x104] sm:$0xf]
        %v380 = vld [vmem:[%s239 + $0x108] sm:$0xf]
        %v381 = vld [vmem:[%s239 + $0x10c] sm:$0xf]
        %v382 = vld [vmem:[%s239 + $0x110] sm:$0xf]
        %v383 = vld [vmem:[%s239 + $0x114] sm:$0xf]
        %v384 = vld [vmem:[%s239 + $0x118] sm:$0xf]
        %v385 = vld [vmem:[%s239 + $0x11c] sm:$0xf]
        %v386 = vld [vmem:[%s239 + $0x120] sm:$0xf]
        %v387 = vld [vmem:[%s239 + $0x124] sm:$0xf]
        %v388 = vld [vmem:[%s239 + $0x128] sm:$0xf]
        %v389 = vld [vmem:[%s239 + $0x12c] sm:$0xf]
        %v390 = vld [vmem:[%s239 + $0x130] sm:$0xf]
        %v391 = vld [vmem:[%s239 + $0x134] sm:$0xf]
        %v392 = vld [vmem:[%s239 + $0x138] sm:$0xf]
        %v393 = vld [vmem:[%s239 + $0x13c] sm:$0xf]
        %v394 = vld [vmem:[%s239 + $0x140] sm:$0xf]
        %v395 = vld [vmem:[%s239 + $0x144] sm:$0xf]
        %v396 = vld [vmem:[%s239 + $0x148] sm:$0xf]
        %v397 = vld [vmem:[%s239 + $0x14c] sm:$0xf]
        %v398 = vld [vmem:[%s239 + $0x150] sm:$0xf]
        %v399 = vld [vmem:[%s239 + $0x154] sm:$0xf]
        %v400 = vld [vmem:[%s239 + $0x158] sm:$0xf]
        %v401 = vld [vmem:[%s239 + $0x15c] sm:$0xf]
        %v402 = vld [vmem:[%s239 + $0x160] sm:$0xf]
        %v403 = vld [vmem:[%s239 + $0x164] sm:$0xf]
        %v404 = vld [vmem:[%s239 + $0x168] sm:$0xf]
        %v405 = vld [vmem:[%s239 + $0x16c] sm:$0xf]
        %v406 = vld [vmem:[%s239 + $0x170] sm:$0xf]
        %v407 = vld [vmem:[%s239 + $0x174] sm:$0xf]
        %v408 = vld [vmem:[%s239 + $0x178] sm:$0xf]
        %v409 = vld [vmem:[%s239 + $0x17c] sm:$0xf]
        %v410 = vld [vmem:[%s239 + $0x180] sm:$0xf]
        %v411 = vld [vmem:[%s239 + $0x184] sm:$0xf]
        %v412 = vld [vmem:[%s239 + $0x188] sm:$0xf]
        %v413 = vld [vmem:[%s239 + $0x18c] sm:$0xf]
        %v414 = vld [vmem:[%s239 + $0x190] sm:$0xf]
        %v415 = vld [vmem:[%s239 + $0x194] sm:$0xf]
        %v416 = vld [vmem:[%s239 + $0x198] sm:$0xf]
        %v417 = vld [vmem:[%s239 + $0x19c] sm:$0xf]
        %v418 = vld [vmem:[%s239 + $0x1a0] sm:$0xf]
        %v419 = vld [vmem:[%s239 + $0x1a4] sm:$0xf]
        %v420 = vld [vmem:[%s239 + $0x1a8] sm:$0xf]
        %v421 = vld [vmem:[%s239 + $0x1ac] sm:$0xf]
        %v422 = vld [vmem:[%s239 + $0x1b0] sm:$0xf]
        %v423 = vld [vmem:[%s239 + $0x1b4] sm:$0xf]
        %v424 = vld [vmem:[%s239 + $0x1b8] sm:$0xf]
        %v425 = vld [vmem:[%s239 + $0x1bc] sm:$0xf]
        %v426 = vld [vmem:[%s239 + $0x1c0] sm:$0xf]
        %v427 = vld [vmem:[%s239 + $0x1c4] sm:$0xf]
        %v428 = vld [vmem:[%s239 + $0x1c8] sm:$0xf]
        %v429 = vld [vmem:[%s239 + $0x1cc] sm:$0xf]
        %v430 = vld [vmem:[%s239 + $0x1d0] sm:$0xf]
        %v431 = vld [vmem:[%s239 + $0x1d4] sm:$0xf]
        %v432 = vld [vmem:[%s239 + $0x1d8] sm:$0xf]
        %v433 = vld [vmem:[%s239 + $0x1dc] sm:$0xf]
        %v434 = vld [vmem:[%s239 + $0x1e0] sm:$0xf]
        %v435 = vld [vmem:[%s239 + $0x1e4] sm:$0xf]
        %v436 = vld [vmem:[%s239 + $0x1e8] sm:$0xf]
        %v437 = vld [vmem:[%s239 + $0x1ec] sm:$0xf]
        %v438 = vld [vmem:[%s239 + $0x1f0] sm:$0xf]
        %v439 = vld [vmem:[%s239 + $0x1f4] sm:$0xf]
        %v440 = vld [vmem:[%s239 + $0x1f8] sm:$0xf]
        %v441 = vld [vmem:[%s239 + $0x1fc] sm:$0xf]
        %v442 = vld [vmem:[%s239 + $0x200] sm:$0xf]
        %v443 = vld [vmem:[%s239 + $0x204] sm:$0xf]
        %v444 = vld [vmem:[%s239 + $0x208] sm:$0xf]
        %v445 = vld [vmem:[%s239 + $0x20c] sm:$0xf]
        %v446 = vld [vmem:[%s239 + $0x210] sm:$0xf]
        %v447 = vld [vmem:[%s239 + $0x214] sm:$0xf]
        %v448 = vld [vmem:[%s239 + $0x218] sm:$0xf]
        %v449 = vld [vmem:[%s239 + $0x21c] sm:$0xf]
        %v450 = vld [vmem:[%s239 + $0x220] sm:$0xf]
        %v451 = vld [vmem:[%s239 + $0x224] sm:$0xf]
        %v452 = vld [vmem:[%s239 + $0x228] sm:$0xf]
        %v453 = vld [vmem:[%s239 + $0x22c] sm:$0xf]
        %v454 = vld [vmem:[%s239 + $0x230] sm:$0xf]
        %v455 = vld [vmem:[%s239 + $0x234] sm:$0xf]
        %v456 = vld [vmem:[%s239 + $0x238] sm:$0xf]
        %v457 = vld [vmem:[%s239 + $0x23c] sm:$0xf]
        %v458 = vld [vmem:[%s239 + $0x240] sm:$0xf]
        %v459 = vld [vmem:[%s239 + $0x244] sm:$0xf]
        %v460 = vld [vmem:[%s239 + $0x248] sm:$0xf]
        %v461 = vld [vmem:[%s239 + $0x24c] sm:$0xf]
        %v462 = vld [vmem:[%s239 + $0x250] sm:$0xf]
        %v463 = vld [vmem:[%s239 + $0x254] sm:$0xf]
        %v464 = vld [vmem:[%s239 + $0x258] sm:$0xf]
        %v465 = vld [vmem:[%s239 + $0x25c] sm:$0xf]
        %v466 = vld [vmem:[%s239 + $0x260] sm:$0xf]
        %v467 = vld [vmem:[%s239 + $0x264] sm:$0xf]
        %v468 = vld [vmem:[%s239 + $0x268] sm:$0xf]
        %v469 = vld [vmem:[%s239 + $0x26c] sm:$0xf]
        %v470 = vld [vmem:[%s239 + $0x270] sm:$0xf]
        %v471 = vld [vmem:[%s239 + $0x274] sm:$0xf]
        %v472 = vld [vmem:[%s239 + $0x278] sm:$0xf]
        %v473 = vld [vmem:[%s239 + $0x27c] sm:$0xf]
        %v474 = vld [vmem:[%s239 + $0x280] sm:$0xf]
        %v475 = vld [vmem:[%s239 + $0x284] sm:$0xf]
        %v476 = vld [vmem:[%s239 + $0x288] sm:$0xf]
        %v477 = vld [vmem:[%s239 + $0x28c] sm:$0xf]
        %v478 = vld [vmem:[%s239 + $0x290] sm:$0xf]
        %v479 = vld [vmem:[%s239 + $0x294] sm:$0xf]
        %v480 = vld [vmem:[%s239 + $0x298] sm:$0xf]
        %v481 = vld [vmem:[%s239 + $0x29c] sm:$0xf]
        %v482 = vld [vmem:[%s239 + $0x2a0] sm:$0xf]
        %v483 = vld [vmem:[%s239 + $0x2a4] sm:$0xf]
        %v484 = vld [vmem:[%s239 + $0x2a8] sm:$0xf]
        %v485 = vld [vmem:[%s239 + $0x2ac] sm:$0xf]
        %v486 = vld [vmem:[%s239 + $0x2b0] sm:$0xf]
        %v487 = vld [vmem:[%s239 + $0x2b4] sm:$0xf]
        %v488 = vld [vmem:[%s239 + $0x2b8] sm:$0xf]
        %v489 = vld [vmem:[%s239 + $0x2bc] sm:$0xf]
        %v490 = vld [vmem:[%s239 + $0x2c0] sm:$0xf]
        %v491 = vld [vmem:[%s239 + $0x2c4] sm:$0xf]
        %v492 = vld [vmem:[%s239 + $0x2c8] sm:$0xf]
        %v493 = vld [vmem:[%s239 + $0x2cc] sm:$0xf]
        %v494 = vld [vmem:[%s239 + $0x2d0] sm:$0xf]
        %v495 = vld [vmem:[%s239 + $0x2d4] sm:$0xf]
        %v496 = vld [vmem:[%s239 + $0x2d8] sm:$0xf]
        %v497 = vld [vmem:[%s239 + $0x2dc] sm:$0xf]
        %v498 = vld [vmem:[%s239 + $0x2e0] sm:$0xf]
        %v499 = vld [vmem:[%s239 + $0x2e4] sm:$0xf]
        %v500 = vld [vmem:[%s239 + $0x2e8] sm:$0xf]
        %v501 = vld [vmem:[%s239 + $0x2ec] sm:$0xf]
        %v502 = vld [vmem:[%s239 + $0x2f0] sm:$0xf]
        %v503 = vld [vmem:[%s239 + $0x2f4] sm:$0xf]
        %v504 = vld [vmem:[%s239 + $0x2f8] sm:$0xf]
        %v505 = vld [vmem:[%s239 + $0x2fc] sm:$0xf]
        %v506 = vld [vmem:[%s239 + $0x300] sm:$0xf]
        %v507 = vld [vmem:[%s239 + $0x304] sm:$0xf]
        %v508 = vld [vmem:[%s239 + $0x308] sm:$0xf]
        %v509 = vld [vmem:[%s239 + $0x30c] sm:$0xf]
        %v510 = vld [vmem:[%s239 + $0x310] sm:$0xf]
        %v511 = vld [vmem:[%s239 + $0x314] sm:$0xf]
        %v512 = vld [vmem:[%s239 + $0x318] sm:$0xf]
        %v513 = vld [vmem:[%s239 + $0x31c] sm:$0xf]
        %v514 = vld [vmem:[%s239 + $0x320] sm:$0xf]
        %v515 = vld [vmem:[%s239 + $0x324] sm:$0xf]
        %v516 = vld [vmem:[%s239 + $0x328] sm:$0xf]
        %v517 = vld [vmem:[%s239 + $0x32c] sm:$0xf]
        %v518 = vld [vmem:[%s239 + $0x330] sm:$0xf]
        %v519 = vld [vmem:[%s239 + $0x334] sm:$0xf]
        %v520 = vld [vmem:[%s239 + $0x338] sm:$0xf]
        %v521 = vld [vmem:[%s239 + $0x33c] sm:$0xf]
        %v522 = vld [vmem:[%s239 + $0x340] sm:$0xf]
        %v523 = vld [vmem:[%s239 + $0x344] sm:$0xf]
        %v524 = vld [vmem:[%s239 + $0x348] sm:$0xf]
        %v525 = vld [vmem:[%s239 + $0x34c] sm:$0xf]
        %v526 = vld [vmem:[%s239 + $0x350] sm:$0xf]
        %v527 = vld [vmem:[%s239 + $0x354] sm:$0xf]
        %v528 = vld [vmem:[%s239 + $0x358] sm:$0xf]
        %v529 = vld [vmem:[%s239 + $0x35c] sm:$0xf]
        %v530 = vld [vmem:[%s239 + $0x360] sm:$0xf]
        %v531 = vld [vmem:[%s239 + $0x364] sm:$0xf]
        %v532 = vld [vmem:[%s239 + $0x368] sm:$0xf]
        %v533 = vld [vmem:[%s239 + $0x36c] sm:$0xf]
        %v534 = vld [vmem:[%s239 + $0x370] sm:$0xf]
        %v535 = vld [vmem:[%s239 + $0x374] sm:$0xf]
        %v536 = vld [vmem:[%s239 + $0x378] sm:$0xf]
        %v537 = vld [vmem:[%s239 + $0x37c] sm:$0xf]
        %v538 = vld [vmem:[%s239 + $0x380] sm:$0xf]
        %v539 = vld [vmem:[%s239 + $0x384] sm:$0xf]
        %v540 = vld [vmem:[%s239 + $0x388] sm:$0xf]
        %v541 = vld [vmem:[%s239 + $0x38c] sm:$0xf]
        %v542 = vld [vmem:[%s239 + $0x390] sm:$0xf]
        %v543 = vld [vmem:[%s239 + $0x394] sm:$0xf]
        %v544 = vld [vmem:[%s239 + $0x398] sm:$0xf]
        %v545 = vld [vmem:[%s239 + $0x39c] sm:$0xf]
        %v546 = vld [vmem:[%s239 + $0x3a0] sm:$0xf]
        %v547 = vld [vmem:[%s239 + $0x3a4] sm:$0xf]
        %v548 = vld [vmem:[%s239 + $0x3a8] sm:$0xf]
        %v549 = vld [vmem:[%s239 + $0x3ac] sm:$0xf]
        %v550 = vld [vmem:[%s239 + $0x3b0] sm:$0xf]
        %v551 = vld [vmem:[%s239 + $0x3b4] sm:$0xf]
        %v552 = vld [vmem:[%s239 + $0x3b8] sm:$0xf]
        %v553 = vld [vmem:[%s239 + $0x3bc] sm:$0xf]
        %v554 = vld [vmem:[%s239 + $0x3c0] sm:$0xf]
        %v555 = vld [vmem:[%s239 + $0x3c4] sm:$0xf]
        %v556 = vld [vmem:[%s239 + $0x3c8] sm:$0xf]
        %v557 = vld [vmem:[%s239 + $0x3cc] sm:$0xf]
        %v558 = vld [vmem:[%s239 + $0x3d0] sm:$0xf]
        %v559 = vld [vmem:[%s239 + $0x3d4] sm:$0xf]
        %v560 = vld [vmem:[%s239 + $0x3d8] sm:$0xf]
        %v561 = vld [vmem:[%s239 + $0x3dc] sm:$0xf]
        %v562 = vld [vmem:[%s239 + $0x3e0] sm:$0xf]
        %v563 = vld [vmem:[%s239 + $0x3e4] sm:$0xf]
        %v564 = vld [vmem:[%s239 + $0x3e8] sm:$0xf]
        %v565 = vld [vmem:[%s239 + $0x3ec] sm:$0xf]
        %v566 = vld [vmem:[%s239 + $0x3f0] sm:$0xf]
        %v567 = vld [vmem:[%s239 + $0x3f4] sm:$0xf]
        %v568 = vld [vmem:[%s239 + $0x3f8] sm:$0xf]
        %v569 = vld [vmem:[%s239 + $0x3fc] sm:$0xf]
        %v570 = vld [vmem:[%s239 + $0x400] sm:$0xf]
        %v571 = vld [vmem:[%s239 + $0x404] sm:$0xf]
        %v572 = vld [vmem:[%s239 + $0x408] sm:$0xf]
        %v573 = vld [vmem:[%s239 + $0x40c] sm:$0xf]
        %v574 = vld [vmem:[%s239 + $0x410] sm:$0xf]
        %v575 = vld [vmem:[%s239 + $0x414] sm:$0xf]
        %v576 = vld [vmem:[%s239 + $0x418] sm:$0xf]
        %v577 = vld [vmem:[%s239 + $0x41c] sm:$0xf]
        %v578 = vld [vmem:[%s239 + $0x420] sm:$0xf]
        %v579 = vld [vmem:[%s239 + $0x424] sm:$0xf]
        %v580 = vld [vmem:[%s239 + $0x428] sm:$0xf]
        %v581 = vld [vmem:[%s239 + $0x42c] sm:$0xf]
        %v582 = vld [vmem:[%s239 + $0x430] sm:$0xf]
        %v583 = vld [vmem:[%s239 + $0x434] sm:$0xf]
        %v584 = vld [vmem:[%s239 + $0x438] sm:$0xf]
        %v585 = vld [vmem:[%s239 + $0x43c] sm:$0xf]
        %v586 = vld [vmem:[%s239 + $0x440] sm:$0xf]
        %v587 = vld [vmem:[%s239 + $0x444] sm:$0xf]
        %v588 = vld [vmem:[%s239 + $0x448] sm:$0xf]
        %v589 = vld [vmem:[%s239 + $0x44c] sm:$0xf]
        %v590 = vld [vmem:[%s239 + $0x450] sm:$0xf]
        %v591 = vld [vmem:[%s239 + $0x454] sm:$0xf]
        %v592 = vld [vmem:[%s239 + $0x458] sm:$0xf]
        %v593 = vld [vmem:[%s239 + $0x45c] sm:$0xf]
        %v594 = vld [vmem:[%s239 + $0x460] sm:$0xf]
        %v595 = vld [vmem:[%s239 + $0x464] sm:$0xf]
        %v596 = vld [vmem:[%s239 + $0x468] sm:$0xf]
        %v597 = vld [vmem:[%s239 + $0x46c] sm:$0xf]
        %v598 = vld [vmem:[%s239 + $0x470] sm:$0xf]
        %v599 = vld [vmem:[%s239 + $0x474] sm:$0xf]
        %v600 = vld [vmem:[%s239 + $0x478] sm:$0xf]
        %v601 = vld [vmem:[%s239 + $0x47c] sm:$0xf]
        %v602 = vld [vmem:[%s239 + $0x480] sm:$0xf]
        %v603 = vld [vmem:[%s239 + $0x484] sm:$0xf]
        %v604 = vld [vmem:[%s239 + $0x488] sm:$0xf]
        %v605 = vld [vmem:[%s239 + $0x48c] sm:$0xf]
        %v606 = vld [vmem:[%s239 + $0x490] sm:$0xf]
        %v607 = vld [vmem:[%s239 + $0x494] sm:$0xf]
        %v608 = vld [vmem:[%s239 + $0x498] sm:$0xf]
        %v609 = vld [vmem:[%s239 + $0x49c] sm:$0xf]
        %v610 = vld [vmem:[%s239 + $0x4a0] sm:$0xf]
        %v611 = vld [vmem:[%s239 + $0x4a4] sm:$0xf]
        %v612 = vld [vmem:[%s239 + $0x4a8] sm:$0xf]
        %v613 = vld [vmem:[%s239 + $0x4ac] sm:$0xf]
        %v614 = vld [vmem:[%s239 + $0x4b0] sm:$0xf]
        %v615 = vld [vmem:[%s239 + $0x4b4] sm:$0xf]
        %v616 = vld [vmem:[%s239 + $0x4b8] sm:$0xf]
        %v617 = vld [vmem:[%s239 + $0x4bc] sm:$0xf]
        %v618 = vld [vmem:[%s239 + $0x4c0] sm:$0xf]
        %v619 = vld [vmem:[%s239 + $0x4c4] sm:$0xf]
        %v620 = vld [vmem:[%s239 + $0x4c8] sm:$0xf]
        %v621 = vld [vmem:[%s239 + $0x4cc] sm:$0xf]
        %v622 = vld [vmem:[%s239 + $0x4d0] sm:$0xf]
        %v623 = vld [vmem:[%s239 + $0x4d4] sm:$0xf]
        %v624 = vld [vmem:[%s239 + $0x4d8] sm:$0xf]
        %v625 = vld [vmem:[%s239 + $0x4dc] sm:$0xf]
        %v626 = vld [vmem:[%s239 + $0x4e0] sm:$0xf]
        %v627 = vld [vmem:[%s239 + $0x4e4] sm:$0xf]
        %v628 = vld [vmem:[%s239 + $0x4e8] sm:$0xf]
        %v629 = vld [vmem:[%s239 + $0x4ec] sm:$0xf]
        %v630 = vld [vmem:[%s239 + $0x4f0] sm:$0xf]
        %v631 = vld [vmem:[%s239 + $0x4f4] sm:$0xf]
        %v632 = vld [vmem:[%s239 + $0x4f8] sm:$0xf]
        %v633 = vld [vmem:[%s239 + $0x4fc] sm:$0xf]
        %v634 = vld [vmem:[%s239 + $0x500] sm:$0xf]
        %v635 = vld [vmem:[%s239 + $0x504] sm:$0xf]
        %v636 = vld [vmem:[%s239 + $0x508] sm:$0xf]
        %v637 = vld [vmem:[%s239 + $0x50c] sm:$0xf]
        %v638 = vld [vmem:[%s239 + $0x510] sm:$0xf]
        %v639 = vld [vmem:[%s239 + $0x514] sm:$0xf]
        %v640 = vld [vmem:[%s239 + $0x518] sm:$0xf]
        %v641 = vld [vmem:[%s239 + $0x51c] sm:$0xf]
        %v642 = vld [vmem:[%s239 + $0x520] sm:$0xf]
        %v643 = vld [vmem:[%s239 + $0x524] sm:$0xf]
        %v644 = vld [vmem:[%s239 + $0x528] sm:$0xf]
        %v645 = vld [vmem:[%s239 + $0x52c] sm:$0xf]
        %v646 = vld [vmem:[%s239 + $0x530] sm:$0xf]
        %v647 = vld [vmem:[%s239 + $0x534] sm:$0xf]
        %v648 = vld [vmem:[%s239 + $0x538] sm:$0xf]
        %v649 = vld [vmem:[%s239 + $0x53c] sm:$0xf]
        %v650 = vld [vmem:[%s239 + $0x540] sm:$0xf]
        %v651 = vld [vmem:[%s239 + $0x544] sm:$0xf]
        %v652 = vld [vmem:[%s239 + $0x548] sm:$0xf]
        %v653 = vld [vmem:[%s239 + $0x54c] sm:$0xf]
        %v654 = vld [vmem:[%s239 + $0x550] sm:$0xf]
        %v655 = vld [vmem:[%s239 + $0x554] sm:$0xf]
        %v656 = vld [vmem:[%s239 + $0x558] sm:$0xf]
        %v657 = vld [vmem:[%s239 + $0x55c] sm:$0xf]
        %v658 = vld [vmem:[%s239 + $0x560] sm:$0xf]
        %v659 = vld [vmem:[%s239 + $0x564] sm:$0xf]
        %v660 = vld [vmem:[%s239 + $0x568] sm:$0xf]
        %v661 = vld [vmem:[%s239 + $0x56c] sm:$0xf]
        %v662 = vld [vmem:[%s239 + $0x570] sm:$0xf]
        %v663 = vld [vmem:[%s239 + $0x574] sm:$0xf]
        %v664 = vld [vmem:[%s239 + $0x578] sm:$0xf]
        %v665 = vld [vmem:[%s239 + $0x57c] sm:$0xf]
        %v666 = vld [vmem:[%s239 + $0x580] sm:$0xf]
        %v667 = vld [vmem:[%s239 + $0x584] sm:$0xf]
        %v668 = vld [vmem:[%s239 + $0x588] sm:$0xf]
        %v669 = vld [vmem:[%s239 + $0x58c] sm:$0xf]
        %v670 = vld [vmem:[%s239 + $0x590] sm:$0xf]
        %v671 = vld [vmem:[%s239 + $0x594] sm:$0xf]
        %v672 = vld [vmem:[%s239 + $0x598] sm:$0xf]
        %v673 = vld [vmem:[%s239 + $0x59c] sm:$0xf]
        %v674 = vld [vmem:[%s239 + $0x5a0] sm:$0xf]
        %v675 = vld [vmem:[%s239 + $0x5a4] sm:$0xf]
        %v676 = vld [vmem:[%s239 + $0x5a8] sm:$0xf]
        %v677 = vld [vmem:[%s239 + $0x5ac] sm:$0xf]
        %v678 = vld [vmem:[%s239 + $0x5b0] sm:$0xf]
        %v679 = vld [vmem:[%s239 + $0x5b4] sm:$0xf]
        %v680 = vld [vmem:[%s239 + $0x5b8] sm:$0xf]
        %v681 = vld [vmem:[%s239 + $0x5bc] sm:$0xf]
        %v682 = vld [vmem:[%s239 + $0x5c0] sm:$0xf]
        %v683 = vld [vmem:[%s239 + $0x5c4] sm:$0xf]
        %v684 = vld [vmem:[%s239 + $0x5c8] sm:$0xf]
        %v685 = vld [vmem:[%s239 + $0x5cc] sm:$0xf]
        %v686 = vld [vmem:[%s239 + $0x5d0] sm:$0xf]
        %v687 = vld [vmem:[%s239 + $0x5d4] sm:$0xf]
        %v688 = vld [vmem:[%s239 + $0x5d8] sm:$0xf]
        %v689 = vld [vmem:[%s239 + $0x5dc] sm:$0xf]
        %v690 = vld [vmem:[%s239 + $0x5e0] sm:$0xf]
        %v691 = vld [vmem:[%s239 + $0x5e4] sm:$0xf]
        %v692 = vld [vmem:[%s239 + $0x5e8] sm:$0xf]
        %v693 = vld [vmem:[%s239 + $0x5ec] sm:$0xf]
        %v694 = vld [vmem:[%s239 + $0x5f0] sm:$0xf]
        %v695 = vld [vmem:[%s239 + $0x5f4] sm:$0xf]
        %v696 = vld [vmem:[%s239 + $0x5f8] sm:$0xf]
        %v697 = vld [vmem:[%s239 + $0x5fc] sm:$0xf]
        %v698 = vld [vmem:[%s239 + $0x600] sm:$0xf]
        %v699 = vld [vmem:[%s239 + $0x604] sm:$0xf]
        %v700 = vld [vmem:[%s239 + $0x608] sm:$0xf]
        %v701 = vld [vmem:[%s239 + $0x60c] sm:$0xf]
        %v702 = vld [vmem:[%s239 + $0x610] sm:$0xf]
        %v703 = vld [vmem:[%s239 + $0x614] sm:$0xf]
        %v704 = vld [vmem:[%s239 + $0x618] sm:$0xf]
        %v705 = vld [vmem:[%s239 + $0x61c] sm:$0xf]
        %v706 = vld [vmem:[%s239 + $0x620] sm:$0xf]
        %v707 = vld [vmem:[%s239 + $0x624] sm:$0xf]
        %v708 = vld [vmem:[%s239 + $0x628] sm:$0xf]
        %v709 = vld [vmem:[%s239 + $0x62c] sm:$0xf]
        %v710 = vld [vmem:[%s239 + $0x630] sm:$0xf]
        %v711 = vld [vmem:[%s239 + $0x634] sm:$0xf]
        %v712 = vld [vmem:[%s239 + $0x638] sm:$0xf]
        %v713 = vld [vmem:[%s239 + $0x63c] sm:$0xf]
        %v714 = vld [vmem:[%s239 + $0x640] sm:$0xf]
        %v715 = vld [vmem:[%s239 + $0x644] sm:$0xf]
        %v716 = vld [vmem:[%s239 + $0x648] sm:$0xf]
        %v717 = vld [vmem:[%s239 + $0x64c] sm:$0xf]
        %v718 = vld [vmem:[%s239 + $0x650] sm:$0xf]
        %v719 = vld [vmem:[%s239 + $0x654] sm:$0xf]
        %v720 = vld [vmem:[%s239 + $0x658] sm:$0xf]
        %v721 = vld [vmem:[%s239 + $0x65c] sm:$0xf]
        %v722 = vld [vmem:[%s239 + $0x660] sm:$0xf]
        %v723 = vld [vmem:[%s239 + $0x664] sm:$0xf]
        %v724 = vld [vmem:[%s239 + $0x668] sm:$0xf]
        %v725 = vld [vmem:[%s239 + $0x66c] sm:$0xf]
        %v726 = vld [vmem:[%s239 + $0x670] sm:$0xf]
        %v727 = vld [vmem:[%s239 + $0x674] sm:$0xf]
        %v728 = vld [vmem:[%s239 + $0x678] sm:$0xf]
        %v729 = vld [vmem:[%s239 + $0x67c] sm:$0xf]
        %v730 = vld [vmem:[%s239 + $0x680] sm:$0xf]
        %v731 = vld [vmem:[%s239 + $0x684] sm:$0xf]
        %v732 = vld [vmem:[%s239 + $0x688] sm:$0xf]
        %v733 = vld [vmem:[%s239 + $0x68c] sm:$0xf]
        %v734 = vld [vmem:[%s239 + $0x690] sm:$0xf]
        %v735 = vld [vmem:[%s239 + $0x694] sm:$0xf]
        %v736 = vld [vmem:[%s239 + $0x698] sm:$0xf]
        %v737 = vld [vmem:[%s239 + $0x69c] sm:$0xf]
        %v738 = vld [vmem:[%s239 + $0x6a0] sm:$0xf]
        %v739 = vld [vmem:[%s239 + $0x6a4] sm:$0xf]
        %v740 = vld [vmem:[%s239 + $0x6a8] sm:$0xf]
        %v741 = vld [vmem:[%s239 + $0x6ac] sm:$0xf]
        %v742 = vld [vmem:[%s239 + $0x6b0] sm:$0xf]
        %v743 = vld [vmem:[%s239 + $0x6b4] sm:$0xf]
        %v744 = vld [vmem:[%s239 + $0x6b8] sm:$0xf]
        %v745 = vld [vmem:[%s239 + $0x6bc] sm:$0xf]
        %v746 = vld [vmem:[%s239 + $0x6c0] sm:$0xf]
        %v747 = vld [vmem:[%s239 + $0x6c4] sm:$0xf]
        %v748 = vld [vmem:[%s239 + $0x6c8] sm:$0xf]
        %v749 = vld [vmem:[%s239 + $0x6cc] sm:$0xf]
        %v750 = vld [vmem:[%s239 + $0x6d0] sm:$0xf]
        %v751 = vld [vmem:[%s239 + $0x6d4] sm:$0xf]
        %v752 = vld [vmem:[%s239 + $0x6d8] sm:$0xf]
        %v753 = vld [vmem:[%s239 + $0x6dc] sm:$0xf]
        %v754 = vld [vmem:[%s239 + $0x6e0] sm:$0xf]
        %v755 = vld [vmem:[%s239 + $0x6e4] sm:$0xf]
        %v756 = vld [vmem:[%s239 + $0x6e8] sm:$0xf]
        %v757 = vld [vmem:[%s239 + $0x6ec] sm:$0xf]
        %v758 = vld [vmem:[%s239 + $0x6f0] sm:$0xf]
        %v759 = vld [vmem:[%s239 + $0x6f4] sm:$0xf]
        %v760 = vld [vmem:[%s239 + $0x6f8] sm:$0xf]
        %v761 = vld [vmem:[%s239 + $0x6fc] sm:$0xf]
        %v762 = vld [vmem:[%s239 + $0x700] sm:$0xf]
        %v763 = vld [vmem:[%s239 + $0x704] sm:$0xf]
        %v764 = vld [vmem:[%s239 + $0x708] sm:$0xf]
        %v765 = vld [vmem:[%s239 + $0x70c] sm:$0xf]
        %v766 = vld [vmem:[%s239 + $0x710] sm:$0xf]
        %v767 = vld [vmem:[%s239 + $0x714] sm:$0xf]
        %v768 = vld [vmem:[%s239 + $0x718] sm:$0xf]
        %v769 = vld [vmem:[%s239 + $0x71c] sm:$0xf]
        %v770 = vld [vmem:[%s239 + $0x720] sm:$0xf]
        %v771 = vld [vmem:[%s239 + $0x724] sm:$0xf]
        %v772 = vld [vmem:[%s239 + $0x728] sm:$0xf]
        %v773 = vld [vmem:[%s239 + $0x72c] sm:$0xf]
        %v774 = vld [vmem:[%s239 + $0x730] sm:$0xf]
        %v775 = vld [vmem:[%s239 + $0x734] sm:$0xf]
        %v776 = vld [vmem:[%s239 + $0x738] sm:$0xf]
        %v777 = vld [vmem:[%s239 + $0x73c] sm:$0xf]
        %v778 = vld [vmem:[%s239 + $0x740] sm:$0xf]
        %v779 = vld [vmem:[%s239 + $0x744] sm:$0xf]
        %v780 = vld [vmem:[%s239 + $0x748] sm:$0xf]
        %v781 = vld [vmem:[%s239 + $0x74c] sm:$0xf]
        %v782 = vld [vmem:[%s239 + $0x750] sm:$0xf]
        %v783 = vld [vmem:[%s239 + $0x754] sm:$0xf]
        %v784 = vld [vmem:[%s239 + $0x758] sm:$0xf]
        %v785 = vld [vmem:[%s239 + $0x75c] sm:$0xf]
        %v786 = vld [vmem:[%s239 + $0x760] sm:$0xf]
        %v787 = vld [vmem:[%s239 + $0x764] sm:$0xf]
        %v788 = vld [vmem:[%s239 + $0x768] sm:$0xf]
        %v789 = vld [vmem:[%s239 + $0x76c] sm:$0xf]
        %v790 = vld [vmem:[%s239 + $0x770] sm:$0xf]
        %v791 = vld [vmem:[%s239 + $0x774] sm:$0xf]
        %v792 = vld [vmem:[%s239 + $0x778] sm:$0xf]
        %v793 = vld [vmem:[%s239 + $0x77c] sm:$0xf]
        %v794 = vld [vmem:[%s239 + $0x780] sm:$0xf]
        %v795 = vld [vmem:[%s239 + $0x784] sm:$0xf]
        %v796 = vld [vmem:[%s239 + $0x788] sm:$0xf]
        %v797 = vld [vmem:[%s239 + $0x78c] sm:$0xf]
        %v798 = vld [vmem:[%s239 + $0x790] sm:$0xf]
        %v799 = vld [vmem:[%s239 + $0x794] sm:$0xf]
        %v800 = vld [vmem:[%s239 + $0x798] sm:$0xf]
        %v801 = vld [vmem:[%s239 + $0x79c] sm:$0xf]
        %v802 = vld [vmem:[%s239 + $0x7a0] sm:$0xf]
        %v803 = vld [vmem:[%s239 + $0x7a4] sm:$0xf]
        %v804 = vld [vmem:[%s239 + $0x7a8] sm:$0xf]
        %v805 = vld [vmem:[%s239 + $0x7ac] sm:$0xf]
        %v806 = vld [vmem:[%s239 + $0x7b0] sm:$0xf]
        %v807 = vld [vmem:[%s239 + $0x7b4] sm:$0xf]
        %v808 = vld [vmem:[%s239 + $0x7b8] sm:$0xf]
        %v809 = vld [vmem:[%s239 + $0x7bc] sm:$0xf]
        %v810 = vld [vmem:[%s239 + $0x7c0] sm:$0xf]
        %v811 = vld [vmem:[%s239 + $0x7c4] sm:$0xf]
        %v812 = vld [vmem:[%s239 + $0x7c8] sm:$0xf]
        %v813 = vld [vmem:[%s239 + $0x7cc] sm:$0xf]
        %v814 = vld [vmem:[%s239 + $0x7d0] sm:$0xf]
        %v815 = vld [vmem:[%s239 + $0x7d4] sm:$0xf]
        %v816 = vld [vmem:[%s239 + $0x7d8] sm:$0xf]
        %v817 = vld [vmem:[%s239 + $0x7dc] sm:$0xf]
        %v818 = vld [vmem:[%s239 + $0x7e0] sm:$0xf]
        %v819 = vld [vmem:[%s239 + $0x7e4] sm:$0xf]
        %v820 = vld [vmem:[%s239 + $0x7e8] sm:$0xf]
        %v821 = vld [vmem:[%s239 + $0x7ec] sm:$0xf]
        %v822 = vld [vmem:[%s239 + $0x7f0] sm:$0xf]
        %v823 = vld [vmem:[%s239 + $0x7f4] sm:$0xf]
        %v824 = vld [vmem:[%s239 + $0x7f8] sm:$0xf]
        %v825 = vld [vmem:[%s239 + $0x7fc] sm:$0xf]
        %v826 = vld [vmem:[%s247] sm:$0x1]
        %v828 = vlaneseq
        %v829 = vshrl.u32 %v828, 7
        %v830 = vsub.s32 0, %v829
        %v831 = vrot.slane %v826, %v830
        %v865 = vunpack.c.l.b16 %v282
        %v866 = vunpack.c.h.b16 %v282
        %v867 = vunpack.c.l.b16 %v283
        %v868 = vunpack.c.h.b16 %v283
        %v869 = vunpack.c.l.b16 %v284
        %v870 = vunpack.c.h.b16 %v284
        %v871 = vunpack.c.l.b16 %v285
        %v872 = vunpack.c.h.b16 %v285
        %v873 = vunpack.c.l.b16 %v286
        %v874 = vunpack.c.h.b16 %v286
        %v875 = vunpack.c.l.b16 %v287
        %v876 = vunpack.c.h.b16 %v287
        %v877 = vunpack.c.l.b16 %v288
        %v878 = vunpack.c.h.b16 %v288
        %v879 = vunpack.c.l.b16 %v289
        %v880 = vunpack.c.h.b16 %v289
        %v881 = vunpack.c.l.b16 %v290
        %v882 = vunpack.c.h.b16 %v290
        %v883 = vunpack.c.l.b16 %v291
        %v884 = vunpack.c.h.b16 %v291
        %v885 = vunpack.c.l.b16 %v292
        %v886 = vunpack.c.h.b16 %v292
        %v887 = vunpack.c.l.b16 %v293
        %v888 = vunpack.c.h.b16 %v293
        %v889 = vunpack.c.l.b16 %v294
        %v890 = vunpack.c.h.b16 %v294
        %v891 = vunpack.c.l.b16 %v295
        %v892 = vunpack.c.h.b16 %v295
        %v893 = vunpack.c.l.b16 %v296
        %v894 = vunpack.c.h.b16 %v296
        %v895 = vunpack.c.l.b16 %v297
        %v896 = vunpack.c.h.b16 %v297
        %v897 = vunpack.c.l.b16 %v298
        %v898 = vunpack.c.h.b16 %v298
        %v899 = vunpack.c.l.b16 %v299
        %v900 = vunpack.c.h.b16 %v299
        %v901 = vunpack.c.l.b16 %v300
        %v902 = vunpack.c.h.b16 %v300
        %v903 = vunpack.c.l.b16 %v301
        %v904 = vunpack.c.h.b16 %v301
        %v905 = vunpack.c.l.b16 %v302
        %v906 = vunpack.c.h.b16 %v302
        %v907 = vunpack.c.l.b16 %v303
        %v908 = vunpack.c.h.b16 %v303
        %v909 = vunpack.c.l.b16 %v304
        %v910 = vunpack.c.h.b16 %v304
        %v911 = vunpack.c.l.b16 %v305
        %v912 = vunpack.c.h.b16 %v305
        %v913 = vunpack.c.l.b16 %v306
        %v914 = vunpack.c.h.b16 %v306
        %v915 = vunpack.c.l.b16 %v307
        %v916 = vunpack.c.h.b16 %v307
        %v917 = vunpack.c.l.b16 %v308
        %v918 = vunpack.c.h.b16 %v308
        %v919 = vunpack.c.l.b16 %v309
        %v920 = vunpack.c.h.b16 %v309
        %v921 = vunpack.c.l.b16 %v310
        %v922 = vunpack.c.h.b16 %v310
        %v923 = vunpack.c.l.b16 %v311
        %v924 = vunpack.c.h.b16 %v311
        %v925 = vunpack.c.l.b16 %v312
        %v926 = vunpack.c.h.b16 %v312
        %v927 = vunpack.c.l.b16 %v313
        %v928 = vunpack.c.h.b16 %v313
        %v929 = vpack.c.b16 %v897, %v865
        %v930 = vpack.c.b16 %v898, %v866
        %v931 = vpack.c.b16 %v899, %v867
        %v932 = vpack.c.b16 %v900, %v868
        %v933 = vpack.c.b16 %v901, %v869
        %v934 = vpack.c.b16 %v902, %v870
        %v935 = vpack.c.b16 %v903, %v871
        %v936 = vpack.c.b16 %v904, %v872
        %v937 = vpack.c.b16 %v905, %v873
        %v938 = vpack.c.b16 %v906, %v874
        %v939 = vpack.c.b16 %v907, %v875
        %v940 = vpack.c.b16 %v908, %v876
        %v941 = vpack.c.b16 %v909, %v877
        %v942 = vpack.c.b16 %v910, %v878
        %v943 = vpack.c.b16 %v911, %v879
        %v944 = vpack.c.b16 %v912, %v880
        %v945 = vpack.c.b16 %v913, %v881
        %v946 = vpack.c.b16 %v914, %v882
        %v947 = vpack.c.b16 %v915, %v883
        %v948 = vpack.c.b16 %v916, %v884
        %v949 = vpack.c.b16 %v917, %v885
        %v950 = vpack.c.b16 %v918, %v886
        %v951 = vpack.c.b16 %v919, %v887
        %v952 = vpack.c.b16 %v920, %v888
        %v953 = vpack.c.b16 %v921, %v889
        %v954 = vpack.c.b16 %v922, %v890
        %v955 = vpack.c.b16 %v923, %v891
        %v956 = vpack.c.b16 %v924, %v892
        %v957 = vpack.c.b16 %v925, %v893
        %v958 = vpack.c.b16 %v926, %v894
        %v959 = vpack.c.b16 %v927, %v895
        %v960 = vpack.c.b16 %v928, %v896
        %v1505 = vunpack.c.l.b16 %v314
        %v1506 = vunpack.c.l.b16 %v315
        %v1507 = vunpack.c.l.b16 %v316
        %v1508 = vunpack.c.l.b16 %v317
        %v1509 = vunpack.c.l.b16 %v318
        %v1510 = vunpack.c.l.b16 %v319
        %v1511 = vunpack.c.l.b16 %v320
        %v1512 = vunpack.c.l.b16 %v321
        %v1513 = vunpack.c.l.b16 %v322
        %v1514 = vunpack.c.l.b16 %v323
        %v1515 = vunpack.c.l.b16 %v324
        %v1516 = vunpack.c.l.b16 %v325
        %v1517 = vunpack.c.l.b16 %v326
        %v1518 = vunpack.c.l.b16 %v327
        %v1519 = vunpack.c.l.b16 %v328
        %v1520 = vunpack.c.l.b16 %v329
        %v1521 = vunpack.c.l.b16 %v330
        %v1522 = vunpack.c.l.b16 %v331
        %v1523 = vunpack.c.l.b16 %v332
        %v1524 = vunpack.c.l.b16 %v333
        %v1525 = vunpack.c.l.b16 %v334
        %v1526 = vunpack.c.l.b16 %v335
        %v1527 = vunpack.c.l.b16 %v336
        %v1528 = vunpack.c.l.b16 %v337
        %v1529 = vunpack.c.l.b16 %v338
        %v1530 = vunpack.c.l.b16 %v339
        %v1531 = vunpack.c.l.b16 %v340
        %v1532 = vunpack.c.l.b16 %v341
        %v1533 = vunpack.c.l.b16 %v342
        %v1534 = vunpack.c.l.b16 %v343
        %v1535 = vunpack.c.l.b16 %v344
        %v1536 = vunpack.c.l.b16 %v345
        %v1537 = vunpack.c.l.b16 %v346
        %v1538 = vunpack.c.l.b16 %v347
        %v1539 = vunpack.c.l.b16 %v348
        %v1540 = vunpack.c.l.b16 %v349
        %v1541 = vunpack.c.l.b16 %v350
        %v1542 = vunpack.c.l.b16 %v351
        %v1543 = vunpack.c.l.b16 %v352
        %v1544 = vunpack.c.l.b16 %v353
        %v1545 = vunpack.c.l.b16 %v354
        %v1546 = vunpack.c.l.b16 %v355
        %v1547 = vunpack.c.l.b16 %v356
        %v1548 = vunpack.c.l.b16 %v357
        %v1549 = vunpack.c.l.b16 %v358
        %v1550 = vunpack.c.l.b16 %v359
        %v1551 = vunpack.c.l.b16 %v360
        %v1552 = vunpack.c.l.b16 %v361
        %v1553 = vunpack.c.l.b16 %v362
        %v1554 = vunpack.c.l.b16 %v363
        %v1555 = vunpack.c.l.b16 %v364
        %v1556 = vunpack.c.l.b16 %v365
        %v1557 = vunpack.c.l.b16 %v366
        %v1558 = vunpack.c.l.b16 %v367
        %v1559 = vunpack.c.l.b16 %v368
        %v1560 = vunpack.c.l.b16 %v369
        %v1561 = vunpack.c.l.b16 %v370
        %v1562 = vunpack.c.l.b16 %v371
        %v1563 = vunpack.c.l.b16 %v372
        %v1564 = vunpack.c.l.b16 %v373
        %v1565 = vunpack.c.l.b16 %v374
        %v1566 = vunpack.c.l.b16 %v375
        %v1567 = vunpack.c.l.b16 %v376
        %v1568 = vunpack.c.l.b16 %v377
        %v1569 = vunpack.c.l.b16 %v378
        %v1570 = vunpack.c.l.b16 %v379
        %v1571 = vunpack.c.l.b16 %v380
        %v1572 = vunpack.c.l.b16 %v381
        %v1573 = vunpack.c.l.b16 %v382
        %v1574 = vunpack.c.l.b16 %v383
        %v1575 = vunpack.c.l.b16 %v384
        %v1576 = vunpack.c.l.b16 %v385
        %v1577 = vunpack.c.l.b16 %v386
        %v1578 = vunpack.c.l.b16 %v387
        %v1579 = vunpack.c.l.b16 %v388
        %v1580 = vunpack.c.l.b16 %v389
        %v1581 = vunpack.c.l.b16 %v390
        %v1582 = vunpack.c.l.b16 %v391
        %v1583 = vunpack.c.l.b16 %v392
        %v1584 = vunpack.c.l.b16 %v393
        %v1585 = vunpack.c.l.b16 %v394
        %v1586 = vunpack.c.l.b16 %v395
        %v1587 = vunpack.c.l.b16 %v396
        %v1588 = vunpack.c.l.b16 %v397
        %v1589 = vunpack.c.l.b16 %v398
        %v1590 = vunpack.c.l.b16 %v399
        %v1591 = vunpack.c.l.b16 %v400
        %v1592 = vunpack.c.l.b16 %v401
        %v1593 = vunpack.c.l.b16 %v402
        %v1594 = vunpack.c.l.b16 %v403
        %v1595 = vunpack.c.l.b16 %v404
        %v1596 = vunpack.c.l.b16 %v405
        %v1597 = vunpack.c.l.b16 %v406
        %v1598 = vunpack.c.l.b16 %v407
        %v1599 = vunpack.c.l.b16 %v408
        %v1600 = vunpack.c.l.b16 %v409
        %v1601 = vunpack.c.l.b16 %v410
        %v1602 = vunpack.c.l.b16 %v411
        %v1603 = vunpack.c.l.b16 %v412
        %v1604 = vunpack.c.l.b16 %v413
        %v1605 = vunpack.c.l.b16 %v414
        %v1606 = vunpack.c.l.b16 %v415
        %v1607 = vunpack.c.l.b16 %v416
        %v1608 = vunpack.c.l.b16 %v417
        %v1609 = vunpack.c.l.b16 %v418
        %v1610 = vunpack.c.l.b16 %v419
        %v1611 = vunpack.c.l.b16 %v420
        %v1612 = vunpack.c.l.b16 %v421
        %v1613 = vunpack.c.l.b16 %v422
        %v1614 = vunpack.c.l.b16 %v423
        %v1615 = vunpack.c.l.b16 %v424
        %v1616 = vunpack.c.l.b16 %v425
        %v1617 = vunpack.c.l.b16 %v426
        %v1618 = vunpack.c.l.b16 %v427
        %v1619 = vunpack.c.l.b16 %v428
        %v1620 = vunpack.c.l.b16 %v429
        %v1621 = vunpack.c.l.b16 %v430
        %v1622 = vunpack.c.l.b16 %v431
        %v1623 = vunpack.c.l.b16 %v432
        %v1624 = vunpack.c.l.b16 %v433
        %v1625 = vunpack.c.l.b16 %v434
        %v1626 = vunpack.c.l.b16 %v435
        %v1627 = vunpack.c.l.b16 %v436
        %v1628 = vunpack.c.l.b16 %v437
        %v1629 = vunpack.c.l.b16 %v438
        %v1630 = vunpack.c.l.b16 %v439
        %v1631 = vunpack.c.l.b16 %v440
        %v1632 = vunpack.c.l.b16 %v441
        %v1633 = vunpack.c.l.b16 %v442
        %v1634 = vunpack.c.l.b16 %v443
        %v1635 = vunpack.c.l.b16 %v444
        %v1636 = vunpack.c.l.b16 %v445
        %v1637 = vunpack.c.l.b16 %v446
        %v1638 = vunpack.c.l.b16 %v447
        %v1639 = vunpack.c.l.b16 %v448
        %v1640 = vunpack.c.l.b16 %v449
        %v1641 = vunpack.c.l.b16 %v450
        %v1642 = vunpack.c.l.b16 %v451
        %v1643 = vunpack.c.l.b16 %v452
        %v1644 = vunpack.c.l.b16 %v453
        %v1645 = vunpack.c.l.b16 %v454
        %v1646 = vunpack.c.l.b16 %v455
        %v1647 = vunpack.c.l.b16 %v456
        %v1648 = vunpack.c.l.b16 %v457
        %v1649 = vunpack.c.l.b16 %v458
        %v1650 = vunpack.c.l.b16 %v459
        %v1651 = vunpack.c.l.b16 %v460
        %v1652 = vunpack.c.l.b16 %v461
        %v1653 = vunpack.c.l.b16 %v462
        %v1654 = vunpack.c.l.b16 %v463
        %v1655 = vunpack.c.l.b16 %v464
        %v1656 = vunpack.c.l.b16 %v465
        %v1657 = vunpack.c.l.b16 %v466
        %v1658 = vunpack.c.l.b16 %v467
        %v1659 = vunpack.c.l.b16 %v468
        %v1660 = vunpack.c.l.b16 %v469
        %v1661 = vunpack.c.l.b16 %v470
        %v1662 = vunpack.c.l.b16 %v471
        %v1663 = vunpack.c.l.b16 %v472
        %v1664 = vunpack.c.l.b16 %v473
        %v1665 = vunpack.c.l.b16 %v474
        %v1666 = vunpack.c.l.b16 %v475
        %v1667 = vunpack.c.l.b16 %v476
        %v1668 = vunpack.c.l.b16 %v477
        %v1669 = vunpack.c.l.b16 %v478
        %v1670 = vunpack.c.l.b16 %v479
        %v1671 = vunpack.c.l.b16 %v480
        %v1672 = vunpack.c.l.b16 %v481
        %v1673 = vunpack.c.l.b16 %v482
        %v1674 = vunpack.c.l.b16 %v483
        %v1675 = vunpack.c.l.b16 %v484
        %v1676 = vunpack.c.l.b16 %v485
        %v1677 = vunpack.c.l.b16 %v486
        %v1678 = vunpack.c.l.b16 %v487
        %v1679 = vunpack.c.l.b16 %v488
        %v1680 = vunpack.c.l.b16 %v489
        %v1681 = vunpack.c.l.b16 %v490
        %v1682 = vunpack.c.l.b16 %v491
        %v1683 = vunpack.c.l.b16 %v492
        %v1684 = vunpack.c.l.b16 %v493
        %v1685 = vunpack.c.l.b16 %v494
        %v1686 = vunpack.c.l.b16 %v495
        %v1687 = vunpack.c.l.b16 %v496
        %v1688 = vunpack.c.l.b16 %v497
        %v1689 = vunpack.c.l.b16 %v498
        %v1690 = vunpack.c.l.b16 %v499
        %v1691 = vunpack.c.l.b16 %v500
        %v1692 = vunpack.c.l.b16 %v501
        %v1693 = vunpack.c.l.b16 %v502
        %v1694 = vunpack.c.l.b16 %v503
        %v1695 = vunpack.c.l.b16 %v504
        %v1696 = vunpack.c.l.b16 %v505
        %v1697 = vunpack.c.l.b16 %v506
        %v1698 = vunpack.c.l.b16 %v507
        %v1699 = vunpack.c.l.b16 %v508
        %v1700 = vunpack.c.l.b16 %v509
        %v1701 = vunpack.c.l.b16 %v510
        %v1702 = vunpack.c.l.b16 %v511
        %v1703 = vunpack.c.l.b16 %v512
        %v1704 = vunpack.c.l.b16 %v513
        %v1705 = vunpack.c.l.b16 %v514
        %v1706 = vunpack.c.l.b16 %v515
        %v1707 = vunpack.c.l.b16 %v516
        %v1708 = vunpack.c.l.b16 %v517
        %v1709 = vunpack.c.l.b16 %v518
        %v1710 = vunpack.c.l.b16 %v519
        %v1711 = vunpack.c.l.b16 %v520
        %v1712 = vunpack.c.l.b16 %v521
        %v1713 = vunpack.c.l.b16 %v522
        %v1714 = vunpack.c.l.b16 %v523
        %v1715 = vunpack.c.l.b16 %v524
        %v1716 = vunpack.c.l.b16 %v525
        %v1717 = vunpack.c.l.b16 %v526
        %v1718 = vunpack.c.l.b16 %v527
        %v1719 = vunpack.c.l.b16 %v528
        %v1720 = vunpack.c.l.b16 %v529
        %v1721 = vunpack.c.l.b16 %v530
        %v1722 = vunpack.c.l.b16 %v531
        %v1723 = vunpack.c.l.b16 %v532
        %v1724 = vunpack.c.l.b16 %v533
        %v1725 = vunpack.c.l.b16 %v534
        %v1726 = vunpack.c.l.b16 %v535
        %v1727 = vunpack.c.l.b16 %v536
        %v1728 = vunpack.c.l.b16 %v537
        %v1729 = vunpack.c.l.b16 %v538
        %v1730 = vunpack.c.l.b16 %v539
        %v1731 = vunpack.c.l.b16 %v540
        %v1732 = vunpack.c.l.b16 %v541
        %v1733 = vunpack.c.l.b16 %v542
        %v1734 = vunpack.c.l.b16 %v543
        %v1735 = vunpack.c.l.b16 %v544
        %v1736 = vunpack.c.l.b16 %v545
        %v1737 = vunpack.c.l.b16 %v546
        %v1738 = vunpack.c.l.b16 %v547
        %v1739 = vunpack.c.l.b16 %v548
        %v1740 = vunpack.c.l.b16 %v549
        %v1741 = vunpack.c.l.b16 %v550
        %v1742 = vunpack.c.l.b16 %v551
        %v1743 = vunpack.c.l.b16 %v552
        %v1744 = vunpack.c.l.b16 %v553
        %v1745 = vunpack.c.l.b16 %v554
        %v1746 = vunpack.c.l.b16 %v555
        %v1747 = vunpack.c.l.b16 %v556
        %v1748 = vunpack.c.l.b16 %v557
        %v1749 = vunpack.c.l.b16 %v558
        %v1750 = vunpack.c.l.b16 %v559
        %v1751 = vunpack.c.l.b16 %v560
        %v1752 = vunpack.c.l.b16 %v561
        %v1753 = vunpack.c.l.b16 %v562
        %v1754 = vunpack.c.l.b16 %v563
        %v1755 = vunpack.c.l.b16 %v564
        %v1756 = vunpack.c.l.b16 %v565
        %v1757 = vunpack.c.l.b16 %v566
        %v1758 = vunpack.c.l.b16 %v567
        %v1759 = vunpack.c.l.b16 %v568
        %v1760 = vunpack.c.l.b16 %v569
        %v1761 = vunpack.c.l.b16 %v570
        %v1762 = vunpack.c.l.b16 %v571
        %v1763 = vunpack.c.l.b16 %v572
        %v1764 = vunpack.c.l.b16 %v573
        %v1765 = vunpack.c.l.b16 %v574
        %v1766 = vunpack.c.l.b16 %v575
        %v1767 = vunpack.c.l.b16 %v576
        %v1768 = vunpack.c.l.b16 %v577
        %v1769 = vunpack.c.l.b16 %v578
        %v1770 = vunpack.c.l.b16 %v579
        %v1771 = vunpack.c.l.b16 %v580
        %v1772 = vunpack.c.l.b16 %v581
        %v1773 = vunpack.c.l.b16 %v582
        %v1774 = vunpack.c.l.b16 %v583
        %v1775 = vunpack.c.l.b16 %v584
        %v1776 = vunpack.c.l.b16 %v585
        %v1777 = vunpack.c.l.b16 %v586
        %v1778 = vunpack.c.l.b16 %v587
        %v1779 = vunpack.c.l.b16 %v588
        %v1780 = vunpack.c.l.b16 %v589
        %v1781 = vunpack.c.l.b16 %v590
        %v1782 = vunpack.c.l.b16 %v591
        %v1783 = vunpack.c.l.b16 %v592
        %v1784 = vunpack.c.l.b16 %v593
        %v1785 = vunpack.c.l.b16 %v594
        %v1786 = vunpack.c.l.b16 %v595
        %v1787 = vunpack.c.l.b16 %v596
        %v1788 = vunpack.c.l.b16 %v597
        %v1789 = vunpack.c.l.b16 %v598
        %v1790 = vunpack.c.l.b16 %v599
        %v1791 = vunpack.c.l.b16 %v600
        %v1792 = vunpack.c.l.b16 %v601
        %v1793 = vunpack.c.l.b16 %v602
        %v1794 = vunpack.c.l.b16 %v603
        %v1795 = vunpack.c.l.b16 %v604
        %v1796 = vunpack.c.l.b16 %v605
        %v1797 = vunpack.c.l.b16 %v606
        %v1798 = vunpack.c.l.b16 %v607
        %v1799 = vunpack.c.l.b16 %v608
        %v1800 = vunpack.c.l.b16 %v609
        %v1801 = vunpack.c.l.b16 %v610
        %v1802 = vunpack.c.l.b16 %v611
        %v1803 = vunpack.c.l.b16 %v612
        %v1804 = vunpack.c.l.b16 %v613
        %v1805 = vunpack.c.l.b16 %v614
        %v1806 = vunpack.c.l.b16 %v615
        %v1807 = vunpack.c.l.b16 %v616
        %v1808 = vunpack.c.l.b16 %v617
        %v1809 = vunpack.c.l.b16 %v618
        %v1810 = vunpack.c.l.b16 %v619
        %v1811 = vunpack.c.l.b16 %v620
        %v1812 = vunpack.c.l.b16 %v621
        %v1813 = vunpack.c.l.b16 %v622
        %v1814 = vunpack.c.l.b16 %v623
        %v1815 = vunpack.c.l.b16 %v624
        %v1816 = vunpack.c.l.b16 %v625
        %v1817 = vunpack.c.l.b16 %v626
        %v1818 = vunpack.c.l.b16 %v627
        %v1819 = vunpack.c.l.b16 %v628
        %v1820 = vunpack.c.l.b16 %v629
        %v1821 = vunpack.c.l.b16 %v630
        %v1822 = vunpack.c.l.b16 %v631
        %v1823 = vunpack.c.l.b16 %v632
        %v1824 = vunpack.c.l.b16 %v633
        %v1825 = vunpack.c.l.b16 %v634
        %v1826 = vunpack.c.l.b16 %v635
        %v1827 = vunpack.c.l.b16 %v636
        %v1828 = vunpack.c.l.b16 %v637
        %v1829 = vunpack.c.l.b16 %v638
        %v1830 = vunpack.c.l.b16 %v639
        %v1831 = vunpack.c.l.b16 %v640
        %v1832 = vunpack.c.l.b16 %v641
        %v1833 = vunpack.c.l.b16 %v642
        %v1834 = vunpack.c.l.b16 %v643
        %v1835 = vunpack.c.l.b16 %v644
        %v1836 = vunpack.c.l.b16 %v645
        %v1837 = vunpack.c.l.b16 %v646
        %v1838 = vunpack.c.l.b16 %v647
        %v1839 = vunpack.c.l.b16 %v648
        %v1840 = vunpack.c.l.b16 %v649
        %v1841 = vunpack.c.l.b16 %v650
        %v1842 = vunpack.c.l.b16 %v651
        %v1843 = vunpack.c.l.b16 %v652
        %v1844 = vunpack.c.l.b16 %v653
        %v1845 = vunpack.c.l.b16 %v654
        %v1846 = vunpack.c.l.b16 %v655
        %v1847 = vunpack.c.l.b16 %v656
        %v1848 = vunpack.c.l.b16 %v657
        %v1849 = vunpack.c.l.b16 %v658
        %v1850 = vunpack.c.l.b16 %v659
        %v1851 = vunpack.c.l.b16 %v660
        %v1852 = vunpack.c.l.b16 %v661
        %v1853 = vunpack.c.l.b16 %v662
        %v1854 = vunpack.c.l.b16 %v663
        %v1855 = vunpack.c.l.b16 %v664
        %v1856 = vunpack.c.l.b16 %v665
        %v1857 = vunpack.c.l.b16 %v666
        %v1858 = vunpack.c.l.b16 %v667
        %v1859 = vunpack.c.l.b16 %v668
        %v1860 = vunpack.c.l.b16 %v669
        %v1861 = vunpack.c.l.b16 %v670
        %v1862 = vunpack.c.l.b16 %v671
        %v1863 = vunpack.c.l.b16 %v672
        %v1864 = vunpack.c.l.b16 %v673
        %v1865 = vunpack.c.l.b16 %v674
        %v1866 = vunpack.c.l.b16 %v675
        %v1867 = vunpack.c.l.b16 %v676
        %v1868 = vunpack.c.l.b16 %v677
        %v1869 = vunpack.c.l.b16 %v678
        %v1870 = vunpack.c.l.b16 %v679
        %v1871 = vunpack.c.l.b16 %v680
        %v1872 = vunpack.c.l.b16 %v681
        %v1873 = vunpack.c.l.b16 %v682
        %v1874 = vunpack.c.l.b16 %v683
        %v1875 = vunpack.c.l.b16 %v684
        %v1876 = vunpack.c.l.b16 %v685
        %v1877 = vunpack.c.l.b16 %v686
        %v1878 = vunpack.c.l.b16 %v687
        %v1879 = vunpack.c.l.b16 %v688
        %v1880 = vunpack.c.l.b16 %v689
        %v1881 = vunpack.c.l.b16 %v690
        %v1882 = vunpack.c.l.b16 %v691
        %v1883 = vunpack.c.l.b16 %v692
        %v1884 = vunpack.c.l.b16 %v693
        %v1885 = vunpack.c.l.b16 %v694
        %v1886 = vunpack.c.l.b16 %v695
        %v1887 = vunpack.c.l.b16 %v696
        %v1888 = vunpack.c.l.b16 %v697
        %v1889 = vunpack.c.l.b16 %v698
        %v1890 = vunpack.c.l.b16 %v699
        %v1891 = vunpack.c.l.b16 %v700
        %v1892 = vunpack.c.l.b16 %v701
        %v1893 = vunpack.c.l.b16 %v702
        %v1894 = vunpack.c.l.b16 %v703
        %v1895 = vunpack.c.l.b16 %v704
        %v1896 = vunpack.c.l.b16 %v705
        %v1897 = vunpack.c.l.b16 %v706
        %v1898 = vunpack.c.l.b16 %v707
        %v1899 = vunpack.c.l.b16 %v708
        %v1900 = vunpack.c.l.b16 %v709
        %v1901 = vunpack.c.l.b16 %v710
        %v1902 = vunpack.c.l.b16 %v711
        %v1903 = vunpack.c.l.b16 %v712
        %v1904 = vunpack.c.l.b16 %v713
        %v1905 = vunpack.c.l.b16 %v714
        %v1906 = vunpack.c.l.b16 %v715
        %v1907 = vunpack.c.l.b16 %v716
        %v1908 = vunpack.c.l.b16 %v717
        %v1909 = vunpack.c.l.b16 %v718
        %v1910 = vunpack.c.l.b16 %v719
        %v1911 = vunpack.c.l.b16 %v720
        %v1912 = vunpack.c.l.b16 %v721
        %v1913 = vunpack.c.l.b16 %v722
        %v1914 = vunpack.c.l.b16 %v723
        %v1915 = vunpack.c.l.b16 %v724
        %v1916 = vunpack.c.l.b16 %v725
        %v1917 = vunpack.c.l.b16 %v726
        %v1918 = vunpack.c.l.b16 %v727
        %v1919 = vunpack.c.l.b16 %v728
        %v1920 = vunpack.c.l.b16 %v729
        %v1921 = vunpack.c.l.b16 %v730
        %v1922 = vunpack.c.l.b16 %v731
        %v1923 = vunpack.c.l.b16 %v732
        %v1924 = vunpack.c.l.b16 %v733
        %v1925 = vunpack.c.l.b16 %v734
        %v1926 = vunpack.c.l.b16 %v735
        %v1927 = vunpack.c.l.b16 %v736
        %v1928 = vunpack.c.l.b16 %v737
        %v1929 = vunpack.c.l.b16 %v738
        %v1930 = vunpack.c.l.b16 %v739
        %v1931 = vunpack.c.l.b16 %v740
        %v1932 = vunpack.c.l.b16 %v741
        %v1933 = vunpack.c.l.b16 %v742
        %v1934 = vunpack.c.l.b16 %v743
        %v1935 = vunpack.c.l.b16 %v744
        %v1936 = vunpack.c.l.b16 %v745
        %v1937 = vunpack.c.l.b16 %v746
        %v1938 = vunpack.c.l.b16 %v747
        %v1939 = vunpack.c.l.b16 %v748
        %v1940 = vunpack.c.l.b16 %v749
        %v1941 = vunpack.c.l.b16 %v750
        %v1942 = vunpack.c.l.b16 %v751
        %v1943 = vunpack.c.l.b16 %v752
        %v1944 = vunpack.c.l.b16 %v753
        %v1945 = vunpack.c.l.b16 %v754
        %v1946 = vunpack.c.l.b16 %v755
        %v1947 = vunpack.c.l.b16 %v756
        %v1948 = vunpack.c.l.b16 %v757
        %v1949 = vunpack.c.l.b16 %v758
        %v1950 = vunpack.c.l.b16 %v759
        %v1951 = vunpack.c.l.b16 %v760
        %v1952 = vunpack.c.l.b16 %v761
        %v1953 = vunpack.c.l.b16 %v762
        %v1954 = vunpack.c.l.b16 %v763
        %v1955 = vunpack.c.l.b16 %v764
        %v1956 = vunpack.c.l.b16 %v765
        %v1957 = vunpack.c.l.b16 %v766
        %v1958 = vunpack.c.l.b16 %v767
        %v1959 = vunpack.c.l.b16 %v768
        %v1960 = vunpack.c.l.b16 %v769
        %v1961 = vunpack.c.l.b16 %v770
        %v1962 = vunpack.c.l.b16 %v771
        %v1963 = vunpack.c.l.b16 %v772
        %v1964 = vunpack.c.l.b16 %v773
        %v1965 = vunpack.c.l.b16 %v774
        %v1966 = vunpack.c.l.b16 %v775
        %v1967 = vunpack.c.l.b16 %v776
        %v1968 = vunpack.c.l.b16 %v777
        %v1969 = vunpack.c.l.b16 %v778
        %v1970 = vunpack.c.l.b16 %v779
        %v1971 = vunpack.c.l.b16 %v780
        %v1972 = vunpack.c.l.b16 %v781
        %v1973 = vunpack.c.l.b16 %v782
        %v1974 = vunpack.c.l.b16 %v783
        %v1975 = vunpack.c.l.b16 %v784
        %v1976 = vunpack.c.l.b16 %v785
        %v1977 = vunpack.c.l.b16 %v786
        %v1978 = vunpack.c.l.b16 %v787
        %v1979 = vunpack.c.l.b16 %v788
        %v1980 = vunpack.c.l.b16 %v789
        %v1981 = vunpack.c.l.b16 %v790
        %v1982 = vunpack.c.l.b16 %v791
        %v1983 = vunpack.c.l.b16 %v792
        %v1984 = vunpack.c.l.b16 %v793
        %v1985 = vunpack.c.l.b16 %v794
        %v1986 = vunpack.c.l.b16 %v795
        %v1987 = vunpack.c.l.b16 %v796
        %v1988 = vunpack.c.l.b16 %v797
        %v1989 = vunpack.c.l.b16 %v798
        %v1990 = vunpack.c.l.b16 %v799
        %v1991 = vunpack.c.l.b16 %v800
        %v1992 = vunpack.c.l.b16 %v801
        %v1993 = vunpack.c.l.b16 %v802
        %v1994 = vunpack.c.l.b16 %v803
        %v1995 = vunpack.c.l.b16 %v804
        %v1996 = vunpack.c.l.b16 %v805
        %v1997 = vunpack.c.l.b16 %v806
        %v1998 = vunpack.c.l.b16 %v807
        %v1999 = vunpack.c.l.b16 %v808
        %v2000 = vunpack.c.l.b16 %v809
        %v2001 = vunpack.c.l.b16 %v810
        %v2002 = vunpack.c.l.b16 %v811
        %v2003 = vunpack.c.l.b16 %v812
        %v2004 = vunpack.c.l.b16 %v813
        %v2005 = vunpack.c.l.b16 %v814
        %v2006 = vunpack.c.l.b16 %v815
        %v2007 = vunpack.c.l.b16 %v816
        %v2008 = vunpack.c.l.b16 %v817
        %v2009 = vunpack.c.l.b16 %v818
        %v2010 = vunpack.c.l.b16 %v819
        %v2011 = vunpack.c.l.b16 %v820
        %v2012 = vunpack.c.l.b16 %v821
        %v2013 = vunpack.c.l.b16 %v822
        %v2014 = vunpack.c.l.b16 %v823
        %v2015 = vunpack.c.l.b16 %v824
        %v2016 = vunpack.c.l.b16 %v825
        %v2017 = vpack.c.b16 %v1506, %v1505
        %v2018 = vpack.c.b16 %v1508, %v1507
        %v2019 = vpack.c.b16 %v1510, %v1509
        %v2020 = vpack.c.b16 %v1512, %v1511
        %v2021 = vpack.c.b16 %v1514, %v1513
        %v2022 = vpack.c.b16 %v1516, %v1515
        %v2023 = vpack.c.b16 %v1518, %v1517
        %v2024 = vpack.c.b16 %v1520, %v1519
        %v2025 = vpack.c.b16 %v1522, %v1521
        %v2026 = vpack.c.b16 %v1524, %v1523
        %v2027 = vpack.c.b16 %v1526, %v1525
        %v2028 = vpack.c.b16 %v1528, %v1527
        %v2029 = vpack.c.b16 %v1530, %v1529
        %v2030 = vpack.c.b16 %v1532, %v1531
        %v2031 = vpack.c.b16 %v1534, %v1533
        %v2032 = vpack.c.b16 %v1536, %v1535
        %v2033 = vpack.c.b16 %v1538, %v1537
        %v2034 = vpack.c.b16 %v1540, %v1539
        %v2035 = vpack.c.b16 %v1542, %v1541
        %v2036 = vpack.c.b16 %v1544, %v1543
        %v2037 = vpack.c.b16 %v1546, %v1545
        %v2038 = vpack.c.b16 %v1548, %v1547
        %v2039 = vpack.c.b16 %v1550, %v1549
        %v2040 = vpack.c.b16 %v1552, %v1551
        %v2041 = vpack.c.b16 %v1554, %v1553
        %v2042 = vpack.c.b16 %v1556, %v1555
        %v2043 = vpack.c.b16 %v1558, %v1557
        %v2044 = vpack.c.b16 %v1560, %v1559
        %v2045 = vpack.c.b16 %v1562, %v1561
        %v2046 = vpack.c.b16 %v1564, %v1563
        %v2047 = vpack.c.b16 %v1566, %v1565
        %v2048 = vpack.c.b16 %v1568, %v1567
        %v2049 = vpack.c.b16 %v1570, %v1569
        %v2050 = vpack.c.b16 %v1572, %v1571
        %v2051 = vpack.c.b16 %v1574, %v1573
        %v2052 = vpack.c.b16 %v1576, %v1575
        %v2053 = vpack.c.b16 %v1578, %v1577
        %v2054 = vpack.c.b16 %v1580, %v1579
        %v2055 = vpack.c.b16 %v1582, %v1581
        %v2056 = vpack.c.b16 %v1584, %v1583
        %v2057 = vpack.c.b16 %v1586, %v1585
        %v2058 = vpack.c.b16 %v1588, %v1587
        %v2059 = vpack.c.b16 %v1590, %v1589
        %v2060 = vpack.c.b16 %v1592, %v1591
        %v2061 = vpack.c.b16 %v1594, %v1593
        %v2062 = vpack.c.b16 %v1596, %v1595
        %v2063 = vpack.c.b16 %v1598, %v1597
        %v2064 = vpack.c.b16 %v1600, %v1599
        %v2065 = vpack.c.b16 %v1602, %v1601
        %v2066 = vpack.c.b16 %v1604, %v1603
        %v2067 = vpack.c.b16 %v1606, %v1605
        %v2068 = vpack.c.b16 %v1608, %v1607
        %v2069 = vpack.c.b16 %v1610, %v1609
        %v2070 = vpack.c.b16 %v1612, %v1611
        %v2071 = vpack.c.b16 %v1614, %v1613
        %v2072 = vpack.c.b16 %v1616, %v1615
        %v2073 = vpack.c.b16 %v1618, %v1617
        %v2074 = vpack.c.b16 %v1620, %v1619
        %v2075 = vpack.c.b16 %v1622, %v1621
        %v2076 = vpack.c.b16 %v1624, %v1623
        %v2077 = vpack.c.b16 %v1626, %v1625
        %v2078 = vpack.c.b16 %v1628, %v1627
        %v2079 = vpack.c.b16 %v1630, %v1629
        %v2080 = vpack.c.b16 %v1632, %v1631
        %v2081 = vpack.c.b16 %v1634, %v1633
        %v2082 = vpack.c.b16 %v1636, %v1635
        %v2083 = vpack.c.b16 %v1638, %v1637
        %v2084 = vpack.c.b16 %v1640, %v1639
        %v2085 = vpack.c.b16 %v1642, %v1641
        %v2086 = vpack.c.b16 %v1644, %v1643
        %v2087 = vpack.c.b16 %v1646, %v1645
        %v2088 = vpack.c.b16 %v1648, %v1647
        %v2089 = vpack.c.b16 %v1650, %v1649
        %v2090 = vpack.c.b16 %v1652, %v1651
        %v2091 = vpack.c.b16 %v1654, %v1653
        %v2092 = vpack.c.b16 %v1656, %v1655
        %v2093 = vpack.c.b16 %v1658, %v1657
        %v2094 = vpack.c.b16 %v1660, %v1659
        %v2095 = vpack.c.b16 %v1662, %v1661
        %v2096 = vpack.c.b16 %v1664, %v1663
        %v2097 = vpack.c.b16 %v1666, %v1665
        %v2098 = vpack.c.b16 %v1668, %v1667
        %v2099 = vpack.c.b16 %v1670, %v1669
        %v2100 = vpack.c.b16 %v1672, %v1671
        %v2101 = vpack.c.b16 %v1674, %v1673
        %v2102 = vpack.c.b16 %v1676, %v1675
        %v2103 = vpack.c.b16 %v1678, %v1677
        %v2104 = vpack.c.b16 %v1680, %v1679
        %v2105 = vpack.c.b16 %v1682, %v1681
        %v2106 = vpack.c.b16 %v1684, %v1683
        %v2107 = vpack.c.b16 %v1686, %v1685
        %v2108 = vpack.c.b16 %v1688, %v1687
        %v2109 = vpack.c.b16 %v1690, %v1689
        %v2110 = vpack.c.b16 %v1692, %v1691
        %v2111 = vpack.c.b16 %v1694, %v1693
        %v2112 = vpack.c.b16 %v1696, %v1695
        %v2113 = vpack.c.b16 %v1698, %v1697
        %v2114 = vpack.c.b16 %v1700, %v1699
        %v2115 = vpack.c.b16 %v1702, %v1701
        %v2116 = vpack.c.b16 %v1704, %v1703
        %v2117 = vpack.c.b16 %v1706, %v1705
        %v2118 = vpack.c.b16 %v1708, %v1707
        %v2119 = vpack.c.b16 %v1710, %v1709
        %v2120 = vpack.c.b16 %v1712, %v1711
        %v2121 = vpack.c.b16 %v1714, %v1713
        %v2122 = vpack.c.b16 %v1716, %v1715
        %v2123 = vpack.c.b16 %v1718, %v1717
        %v2124 = vpack.c.b16 %v1720, %v1719
        %v2125 = vpack.c.b16 %v1722, %v1721
        %v2126 = vpack.c.b16 %v1724, %v1723
        %v2127 = vpack.c.b16 %v1726, %v1725
        %v2128 = vpack.c.b16 %v1728, %v1727
        %v2129 = vpack.c.b16 %v1730, %v1729
        %v2130 = vpack.c.b16 %v1732, %v1731
        %v2131 = vpack.c.b16 %v1734, %v1733
        %v2132 = vpack.c.b16 %v1736, %v1735
        %v2133 = vpack.c.b16 %v1738, %v1737
        %v2134 = vpack.c.b16 %v1740, %v1739
        %v2135 = vpack.c.b16 %v1742, %v1741
        %v2136 = vpack.c.b16 %v1744, %v1743
        %v2137 = vpack.c.b16 %v1746, %v1745
        %v2138 = vpack.c.b16 %v1748, %v1747
        %v2139 = vpack.c.b16 %v1750, %v1749
        %v2140 = vpack.c.b16 %v1752, %v1751
        %v2141 = vpack.c.b16 %v1754, %v1753
        %v2142 = vpack.c.b16 %v1756, %v1755
        %v2143 = vpack.c.b16 %v1758, %v1757
        %v2144 = vpack.c.b16 %v1760, %v1759
        %v2145 = vpack.c.b16 %v1762, %v1761
        %v2146 = vpack.c.b16 %v1764, %v1763
        %v2147 = vpack.c.b16 %v1766, %v1765
        %v2148 = vpack.c.b16 %v1768, %v1767
        %v2149 = vpack.c.b16 %v1770, %v1769
        %v2150 = vpack.c.b16 %v1772, %v1771
        %v2151 = vpack.c.b16 %v1774, %v1773
        %v2152 = vpack.c.b16 %v1776, %v1775
        %v2153 = vpack.c.b16 %v1778, %v1777
        %v2154 = vpack.c.b16 %v1780, %v1779
        %v2155 = vpack.c.b16 %v1782, %v1781
        %v2156 = vpack.c.b16 %v1784, %v1783
        %v2157 = vpack.c.b16 %v1786, %v1785
        %v2158 = vpack.c.b16 %v1788, %v1787
        %v2159 = vpack.c.b16 %v1790, %v1789
        %v2160 = vpack.c.b16 %v1792, %v1791
        %v2161 = vpack.c.b16 %v1794, %v1793
        %v2162 = vpack.c.b16 %v1796, %v1795
        %v2163 = vpack.c.b16 %v1798, %v1797
        %v2164 = vpack.c.b16 %v1800, %v1799
        %v2165 = vpack.c.b16 %v1802, %v1801
        %v2166 = vpack.c.b16 %v1804, %v1803
        %v2167 = vpack.c.b16 %v1806, %v1805
        %v2168 = vpack.c.b16 %v1808, %v1807
        %v2169 = vpack.c.b16 %v1810, %v1809
        %v2170 = vpack.c.b16 %v1812, %v1811
        %v2171 = vpack.c.b16 %v1814, %v1813
        %v2172 = vpack.c.b16 %v1816, %v1815
        %v2173 = vpack.c.b16 %v1818, %v1817
        %v2174 = vpack.c.b16 %v1820, %v1819
        %v2175 = vpack.c.b16 %v1822, %v1821
        %v2176 = vpack.c.b16 %v1824, %v1823
        %v2177 = vpack.c.b16 %v1826, %v1825
        %v2178 = vpack.c.b16 %v1828, %v1827
        %v2179 = vpack.c.b16 %v1830, %v1829
        %v2180 = vpack.c.b16 %v1832, %v1831
        %v2181 = vpack.c.b16 %v1834, %v1833
        %v2182 = vpack.c.b16 %v1836, %v1835
        %v2183 = vpack.c.b16 %v1838, %v1837
        %v2184 = vpack.c.b16 %v1840, %v1839
        %v2185 = vpack.c.b16 %v1842, %v1841
        %v2186 = vpack.c.b16 %v1844, %v1843
        %v2187 = vpack.c.b16 %v1846, %v1845
        %v2188 = vpack.c.b16 %v1848, %v1847
        %v2189 = vpack.c.b16 %v1850, %v1849
        %v2190 = vpack.c.b16 %v1852, %v1851
        %v2191 = vpack.c.b16 %v1854, %v1853
        %v2192 = vpack.c.b16 %v1856, %v1855
        %v2193 = vpack.c.b16 %v1858, %v1857
        %v2194 = vpack.c.b16 %v1860, %v1859
        %v2195 = vpack.c.b16 %v1862, %v1861
        %v2196 = vpack.c.b16 %v1864, %v1863
        %v2197 = vpack.c.b16 %v1866, %v1865
        %v2198 = vpack.c.b16 %v1868, %v1867
        %v2199 = vpack.c.b16 %v1870, %v1869
        %v2200 = vpack.c.b16 %v1872, %v1871
        %v2201 = vpack.c.b16 %v1874, %v1873
        %v2202 = vpack.c.b16 %v1876, %v1875
        %v2203 = vpack.c.b16 %v1878, %v1877
        %v2204 = vpack.c.b16 %v1880, %v1879
        %v2205 = vpack.c.b16 %v1882, %v1881
        %v2206 = vpack.c.b16 %v1884, %v1883
        %v2207 = vpack.c.b16 %v1886, %v1885
        %v2208 = vpack.c.b16 %v1888, %v1887
        %v2209 = vpack.c.b16 %v1890, %v1889
        %v2210 = vpack.c.b16 %v1892, %v1891
        %v2211 = vpack.c.b16 %v1894, %v1893
        %v2212 = vpack.c.b16 %v1896, %v1895
        %v2213 = vpack.c.b16 %v1898, %v1897
        %v2214 = vpack.c.b16 %v1900, %v1899
        %v2215 = vpack.c.b16 %v1902, %v1901
        %v2216 = vpack.c.b16 %v1904, %v1903
        %v2217 = vpack.c.b16 %v1906, %v1905
        %v2218 = vpack.c.b16 %v1908, %v1907
        %v2219 = vpack.c.b16 %v1910, %v1909
        %v2220 = vpack.c.b16 %v1912, %v1911
        %v2221 = vpack.c.b16 %v1914, %v1913
        %v2222 = vpack.c.b16 %v1916, %v1915
        %v2223 = vpack.c.b16 %v1918, %v1917
        %v2224 = vpack.c.b16 %v1920, %v1919
        %v2225 = vpack.c.b16 %v1922, %v1921
        %v2226 = vpack.c.b16 %v1924, %v1923
        %v2227 = vpack.c.b16 %v1926, %v1925
        %v2228 = vpack.c.b16 %v1928, %v1927
        %v2229 = vpack.c.b16 %v1930, %v1929
        %v2230 = vpack.c.b16 %v1932, %v1931
        %v2231 = vpack.c.b16 %v1934, %v1933
        %v2232 = vpack.c.b16 %v1936, %v1935
        %v2233 = vpack.c.b16 %v1938, %v1937
        %v2234 = vpack.c.b16 %v1940, %v1939
        %v2235 = vpack.c.b16 %v1942, %v1941
        %v2236 = vpack.c.b16 %v1944, %v1943
        %v2237 = vpack.c.b16 %v1946, %v1945
        %v2238 = vpack.c.b16 %v1948, %v1947
        %v2239 = vpack.c.b16 %v1950, %v1949
        %v2240 = vpack.c.b16 %v1952, %v1951
        %v2241 = vpack.c.b16 %v1954, %v1953
        %v2242 = vpack.c.b16 %v1956, %v1955
        %v2243 = vpack.c.b16 %v1958, %v1957
        %v2244 = vpack.c.b16 %v1960, %v1959
        %v2245 = vpack.c.b16 %v1962, %v1961
        %v2246 = vpack.c.b16 %v1964, %v1963
        %v2247 = vpack.c.b16 %v1966, %v1965
        %v2248 = vpack.c.b16 %v1968, %v1967
        %v2249 = vpack.c.b16 %v1970, %v1969
        %v2250 = vpack.c.b16 %v1972, %v1971
        %v2251 = vpack.c.b16 %v1974, %v1973
        %v2252 = vpack.c.b16 %v1976, %v1975
        %v2253 = vpack.c.b16 %v1978, %v1977
        %v2254 = vpack.c.b16 %v1980, %v1979
        %v2255 = vpack.c.b16 %v1982, %v1981
        %v2256 = vpack.c.b16 %v1984, %v1983
        %v2257 = vpack.c.b16 %v1986, %v1985
        %v2258 = vpack.c.b16 %v1988, %v1987
        %v2259 = vpack.c.b16 %v1990, %v1989
        %v2260 = vpack.c.b16 %v1992, %v1991
        %v2261 = vpack.c.b16 %v1994, %v1993
        %v2262 = vpack.c.b16 %v1996, %v1995
        %v2263 = vpack.c.b16 %v1998, %v1997
        %v2264 = vpack.c.b16 %v2000, %v1999
        %v2265 = vpack.c.b16 %v2002, %v2001
        %v2266 = vpack.c.b16 %v2004, %v2003
        %v2267 = vpack.c.b16 %v2006, %v2005
        %v2268 = vpack.c.b16 %v2008, %v2007
        %v2269 = vpack.c.b16 %v2010, %v2009
        %v2270 = vpack.c.b16 %v2012, %v2011
        %v2271 = vpack.c.b16 %v2014, %v2013
        %v2272 = vpack.c.b16 %v2016, %v2015
        %2529 = vmatprep.subr.bf16.mxu0 0
        %2530 = vmatpush1.bf16.msra.mxu0 %v2017
        %2531 = vmatprep.subr.bf16.mxu0 0
        %2532 = vmatpush1.bf16.msra.mxu0 %v2018
        %2533 = vmatprep.subr.bf16.mxu0 0
        %2534 = vmatpush1.bf16.msra.mxu0 %v2019
        %2535 = vmatprep.subr.bf16.mxu0 0
        %2536 = vmatpush1.bf16.msra.mxu0 %v2020
        %2537 = vmatprep.subr.bf16.mxu0 0
        %2538 = vmatpush1.bf16.msra.mxu0 %v2021
        %2539 = vmatprep.subr.bf16.mxu0 0
        %2540 = vmatpush1.bf16.msra.mxu0 %v2022
        %2541 = vmatprep.subr.bf16.mxu0 0
        %2542 = vmatpush1.bf16.msra.mxu0 %v2023
        %2543 = vmatprep.subr.bf16.mxu0 0
        %2544 = vmatpush1.bf16.msra.mxu0 %v2024
        %2545 = vmatprep.subr.bf16.mxu0 0
        %2546 = vmatpush1.bf16.msra.mxu0 %v2025
        %2547 = vmatprep.subr.bf16.mxu0 0
        %2548 = vmatpush1.bf16.msra.mxu0 %v2026
        %2549 = vmatprep.subr.bf16.mxu0 0
        %2550 = vmatpush1.bf16.msra.mxu0 %v2027
        %2551 = vmatprep.subr.bf16.mxu0 0
        %2552 = vmatpush1.bf16.msra.mxu0 %v2028
        %2553 = vmatprep.subr.bf16.mxu0 0
        %2554 = vmatpush1.bf16.msra.mxu0 %v2029
        %2555 = vmatprep.subr.bf16.mxu0 0
        %2556 = vmatpush1.bf16.msra.mxu0 %v2030
        %2557 = vmatprep.subr.bf16.mxu0 0
        %2558 = vmatpush1.bf16.msra.mxu0 %v2031
        %2559 = vmatprep.subr.bf16.mxu0 0
        %2560 = vmatpush1.bf16.msra.mxu0 %v2032
        %2561 = vmatprep.mubr.bf16.mxu0 %v930
        %2562 = vmatmul.mubr.bf16.gmra.mrb[0].mxu0 %v929
        %v2563 = vpop.f32.mrb[0].mxu0
        %v2564 = vadd.f32 %v831, %v2563
        %v2565 = vpop.f32.mrb[0].mxu0
        %v2566 = vpop.f32.mrb[0].mxu0
        %v2567 = vadd.f32 %v831, %v2566
        %v2568 = vpop.f32.mrb[0].mxu0
        %2569 = vdwg.mxu0
        %2570 = vmatprep.subr.bf16.mxu0 0
        %2571 = vmatpush1.bf16.msra.mxu0 %v2033
        %2572 = vmatprep.subr.bf16.mxu0 0
        %2573 = vmatpush1.bf16.msra.mxu0 %v2034
        %2574 = vmatprep.subr.bf16.mxu0 0
        %2575 = vmatpush1.bf16.msra.mxu0 %v2035
        %2576 = vmatprep.subr.bf16.mxu0 0
        %2577 = vmatpush1.bf16.msra.mxu0 %v2036
        %2578 = vmatprep.subr.bf16.mxu0 0
        %2579 = vmatpush1.bf16.msra.mxu0 %v2037
        %2580 = vmatprep.subr.bf16.mxu0 0
        %2581 = vmatpush1.bf16.msra.mxu0 %v2038
        %2582 = vmatprep.subr.bf16.mxu0 0
        %2583 = vmatpush1.bf16.msra.mxu0 %v2039
        %2584 = vmatprep.subr.bf16.mxu0 0
        %2585 = vmatpush1.bf16.msra.mxu0 %v2040
        %2586 = vmatprep.subr.bf16.mxu0 0
        %2587 = vmatpush1.bf16.msra.mxu0 %v2041
        %2588 = vmatprep.subr.bf16.mxu0 0
        %2589 = vmatpush1.bf16.msra.mxu0 %v2042
        %2590 = vmatprep.subr.bf16.mxu0 0
        %2591 = vmatpush1.bf16.msra.mxu0 %v2043
        %2592 = vmatprep.subr.bf16.mxu0 0
        %2593 = vmatpush1.bf16.msra.mxu0 %v2044
        %2594 = vmatprep.subr.bf16.mxu0 0
        %2595 = vmatpush1.bf16.msra.mxu0 %v2045
        %2596 = vmatprep.subr.bf16.mxu0 0
        %2597 = vmatpush1.bf16.msra.mxu0 %v2046
        %2598 = vmatprep.subr.bf16.mxu0 0
        %2599 = vmatpush1.bf16.msra.mxu0 %v2047
        %2600 = vmatprep.subr.bf16.mxu0 0
        %2601 = vmatpush1.bf16.msra.mxu0 %v2048
        %2602 = vmatprep.mubr.bf16.mxu0 %v932
        %2603 = vmatmul.mubr.bf16.gmra.mrb[0].mxu0 %v931
        %v2604 = vpop.f32.mrb[0].mxu0
        %v2605 = vadd.f32 %v2564, %v2604
        %v2606 = vpop.f32.mrb[0].mxu0
        %v2607 = vpop.f32.mrb[0].mxu0
        %v2608 = vadd.f32 %v2567, %v2607
        %v2609 = vpop.f32.mrb[0].mxu0
        %2610 = vdwg.mxu0
        %2611 = vmatprep.subr.bf16.mxu0 0
        %2612 = vmatpush1.bf16.msra.mxu0 %v2049
        %2613 = vmatprep.subr.bf16.mxu0 0
        %2614 = vmatpush1.bf16.msra.mxu0 %v2050
        %2615 = vmatprep.subr.bf16.mxu0 0
        %2616 = vmatpush1.bf16.msra.mxu0 %v2051
        %2617 = vmatprep.subr.bf16.mxu0 0
        %2618 = vmatpush1.bf16.msra.mxu0 %v2052
        %2619 = vmatprep.subr.bf16.mxu0 0
        %2620 = vmatpush1.bf16.msra.mxu0 %v2053
        %2621 = vmatprep.subr.bf16.mxu0 0
        %2622 = vmatpush1.bf16.msra.mxu0 %v2054
        %2623 = vmatprep.subr.bf16.mxu0 0
        %2624 = vmatpush1.bf16.msra.mxu0 %v2055
        %2625 = vmatprep.subr.bf16.mxu0 0
        %2626 = vmatpush1.bf16.msra.mxu0 %v2056
        %2627 = vmatprep.subr.bf16.mxu0 0
        %2628 = vmatpush1.bf16.msra.mxu0 %v2057
        %2629 = vmatprep.subr.bf16.mxu0 0
        %2630 = vmatpush1.bf16.msra.mxu0 %v2058
        %2631 = vmatprep.subr.bf16.mxu0 0
        %2632 = vmatpush1.bf16.msra.mxu0 %v2059
        %2633 = vmatprep.subr.bf16.mxu0 0
        %2634 = vmatpush1.bf16.msra.mxu0 %v2060
        %2635 = vmatprep.subr.bf16.mxu0 0
        %2636 = vmatpush1.bf16.msra.mxu0 %v2061
        %2637 = vmatprep.subr.bf16.mxu0 0
        %2638 = vmatpush1.bf16.msra.mxu0 %v2062
        %2639 = vmatprep.subr.bf16.mxu0 0
        %2640 = vmatpush1.bf16.msra.mxu0 %v2063
        %2641 = vmatprep.subr.bf16.mxu0 0
        %2642 = vmatpush1.bf16.msra.mxu0 %v2064
        %2643 = vmatprep.mubr.bf16.mxu0 %v934
        %2644 = vmatmul.mubr.bf16.gmra.mrb[0].mxu0 %v933
        %v2645 = vpop.f32.mrb[0].mxu0
        %v2646 = vadd.f32 %v2605, %v2645
        %v2647 = vpop.f32.mrb[0].mxu0
        %v2648 = vpop.f32.mrb[0].mxu0
        %v2649 = vadd.f32 %v2608, %v2648
        %v2650 = vpop.f32.mrb[0].mxu0
        %2651 = vdwg.mxu0
        %2652 = vmatprep.subr.bf16.mxu0 0
        %2653 = vmatpush1.bf16.msra.mxu0 %v2065
        %2654 = vmatprep.subr.bf16.mxu0 0
        %2655 = vmatpush1.bf16.msra.mxu0 %v2066
        %2656 = vmatprep.subr.bf16.mxu0 0
        %2657 = vmatpush1.bf16.msra.mxu0 %v2067
        %2658 = vmatprep.subr.bf16.mxu0 0
        %2659 = vmatpush1.bf16.msra.mxu0 %v2068
        %2660 = vmatprep.subr.bf16.mxu0 0
        %2661 = vmatpush1.bf16.msra.mxu0 %v2069
        %2662 = vmatprep.subr.bf16.mxu0 0
        %2663 = vmatpush1.bf16.msra.mxu0 %v2070
        %2664 = vmatprep.subr.bf16.mxu0 0
        %2665 = vmatpush1.bf16.msra.mxu0 %v2071
        %2666 = vmatprep.subr.bf16.mxu0 0
        %2667 = vmatpush1.bf16.msra.mxu0 %v2072
        %2668 = vmatprep.subr.bf16.mxu0 0
        %2669 = vmatpush1.bf16.msra.mxu0 %v2073
        %2670 = vmatprep.subr.bf16.mxu0 0
        %2671 = vmatpush1.bf16.msra.mxu0 %v2074
        %2672 = vmatprep.subr.bf16.mxu0 0
        %2673 = vmatpush1.bf16.msra.mxu0 %v2075
        %2674 = vmatprep.subr.bf16.mxu0 0
        %2675 = vmatpush1.bf16.msra.mxu0 %v2076
        %2676 = vmatprep.subr.bf16.mxu0 0
        %2677 = vmatpush1.bf16.msra.mxu0 %v2077
        %2678 = vmatprep.subr.bf16.mxu0 0
        %2679 = vmatpush1.bf16.msra.mxu0 %v2078
        %2680 = vmatprep.subr.bf16.mxu0 0
        %2681 = vmatpush1.bf16.msra.mxu0 %v2079
        %2682 = vmatprep.subr.bf16.mxu0 0
        %2683 = vmatpush1.bf16.msra.mxu0 %v2080
        %2684 = vmatprep.mubr.bf16.mxu0 %v936
        %2685 = vmatmul.mubr.bf16.gmra.mrb[0].mxu0 %v935
        %v2686 = vpop.f32.mrb[0].mxu0
        %v2687 = vadd.f32 %v2646, %v2686
        %v2688 = vpop.f32.mrb[0].mxu0
        %v2689 = vpop.f32.mrb[0].mxu0
        %v2690 = vadd.f32 %v2649, %v2689
        %v2691 = vpop.f32.mrb[0].mxu0
        %2692 = vdwg.mxu0
        %2693 = vmatprep.subr.bf16.mxu0 0
        %2694 = vmatpush1.bf16.msra.mxu0 %v2081
        %2695 = vmatprep.subr.bf16.mxu0 0
        %2696 = vmatpush1.bf16.msra.mxu0 %v2082
        %2697 = vmatprep.subr.bf16.mxu0 0
        %2698 = vmatpush1.bf16.msra.mxu0 %v2083
        %2699 = vmatprep.subr.bf16.mxu0 0
        %2700 = vmatpush1.bf16.msra.mxu0 %v2084
        %2701 = vmatprep.subr.bf16.mxu0 0
        %2702 = vmatpush1.bf16.msra.mxu0 %v2085
        %2703 = vmatprep.subr.bf16.mxu0 0
        %2704 = vmatpush1.bf16.msra.mxu0 %v2086
        %2705 = vmatprep.subr.bf16.mxu0 0
        %2706 = vmatpush1.bf16.msra.mxu0 %v2087
        %2707 = vmatprep.subr.bf16.mxu0 0
        %2708 = vmatpush1.bf16.msra.mxu0 %v2088
        %2709 = vmatprep.subr.bf16.mxu0 0
        %2710 = vmatpush1.bf16.msra.mxu0 %v2089
        %2711 = vmatprep.subr.bf16.mxu0 0
        %2712 = vmatpush1.bf16.msra.mxu0 %v2090
        %2713 = vmatprep.subr.bf16.mxu0 0
        %2714 = vmatpush1.bf16.msra.mxu0 %v2091
        %2715 = vmatprep.subr.bf16.mxu0 0
        %2716 = vmatpush1.bf16.msra.mxu0 %v2092
        %2717 = vmatprep.subr.bf16.mxu0 0
        %2718 = vmatpush1.bf16.msra.mxu0 %v2093
        %2719 = vmatprep.subr.bf16.mxu0 0
        %2720 = vmatpush1.bf16.msra.mxu0 %v2094
        %2721 = vmatprep.subr.bf16.mxu0 0
        %2722 = vmatpush1.bf16.msra.mxu0 %v2095
        %2723 = vmatprep.subr.bf16.mxu0 0
        %2724 = vmatpush1.bf16.msra.mxu0 %v2096
        %2725 = vmatprep.mubr.bf16.mxu0 %v938
        %2726 = vmatmul.mubr.bf16.gmra.mrb[0].mxu0 %v937
        %v2727 = vpop.f32.mrb[0].mxu0
        %v2728 = vadd.f32 %v2687, %v2727
        %v2729 = vpop.f32.mrb[0].mxu0
        %v2730 = vpop.f32.mrb[0].mxu0
        %v2731 = vadd.f32 %v2690, %v2730
        %v2732 = vpop.f32.mrb[0].mxu0
        %2733 = vdwg.mxu0
        %2734 = vmatprep.subr.bf16.mxu0 0
        %2735 = vmatpush1.bf16.msra.mxu0 %v2097
        %2736 = vmatprep.subr.bf16.mxu0 0
        %2737 = vmatpush1.bf16.msra.mxu0 %v2098
        %2738 = vmatprep.subr.bf16.mxu0 0
        %2739 = vmatpush1.bf16.msra.mxu0 %v2099
        %2740 = vmatprep.subr.bf16.mxu0 0
        %2741 = vmatpush1.bf16.msra.mxu0 %v2100
        %2742 = vmatprep.subr.bf16.mxu0 0
        %2743 = vmatpush1.bf16.msra.mxu0 %v2101
        %2744 = vmatprep.subr.bf16.mxu0 0
        %2745 = vmatpush1.bf16.msra.mxu0 %v2102
        %2746 = vmatprep.subr.bf16.mxu0 0
        %2747 = vmatpush1.bf16.msra.mxu0 %v2103
        %2748 = vmatprep.subr.bf16.mxu0 0
        %2749 = vmatpush1.bf16.msra.mxu0 %v2104
        %2750 = vmatprep.subr.bf16.mxu0 0
        %2751 = vmatpush1.bf16.msra.mxu0 %v2105
        %2752 = vmatprep.subr.bf16.mxu0 0
        %2753 = vmatpush1.bf16.msra.mxu0 %v2106
        %2754 = vmatprep.subr.bf16.mxu0 0
        %2755 = vmatpush1.bf16.msra.mxu0 %v2107
        %2756 = vmatprep.subr.bf16.mxu0 0
        %2757 = vmatpush1.bf16.msra.mxu0 %v2108
        %2758 = vmatprep.subr.bf16.mxu0 0
        %2759 = vmatpush1.bf16.msra.mxu0 %v2109
        %2760 = vmatprep.subr.bf16.mxu0 0
        %2761 = vmatpush1.bf16.msra.mxu0 %v2110
        %2762 = vmatprep.subr.bf16.mxu0 0
        %2763 = vmatpush1.bf16.msra.mxu0 %v2111
        %2764 = vmatprep.subr.bf16.mxu0 0
        %2765 = vmatpush1.bf16.msra.mxu0 %v2112
        %2766 = vmatprep.mubr.bf16.mxu0 %v940
        %2767 = vmatmul.mubr.bf16.gmra.mrb[0].mxu0 %v939
        %v2768 = vpop.f32.mrb[0].mxu0
        %v2769 = vadd.f32 %v2728, %v2768
        %v2770 = vpop.f32.mrb[0].mxu0
        %v2771 = vpop.f32.mrb[0].mxu0
        %v2772 = vadd.f32 %v2731, %v2771
        %v2773 = vpop.f32.mrb[0].mxu0
        %2774 = vdwg.mxu0
        %2775 = vmatprep.subr.bf16.mxu0 0
        %2776 = vmatpush1.bf16.msra.mxu0 %v2113
        %2777 = vmatprep.subr.bf16.mxu0 0
        %2778 = vmatpush1.bf16.msra.mxu0 %v2114
        %2779 = vmatprep.subr.bf16.mxu0 0
        %2780 = vmatpush1.bf16.msra.mxu0 %v2115
        %2781 = vmatprep.subr.bf16.mxu0 0
        %2782 = vmatpush1.bf16.msra.mxu0 %v2116
        %2783 = vmatprep.subr.bf16.mxu0 0
        %2784 = vmatpush1.bf16.msra.mxu0 %v2117
        %2785 = vmatprep.subr.bf16.mxu0 0
        %2786 = vmatpush1.bf16.msra.mxu0 %v2118
        %2787 = vmatprep.subr.bf16.mxu0 0
        %2788 = vmatpush1.bf16.msra.mxu0 %v2119
        %2789 = vmatprep.subr.bf16.mxu0 0
        %2790 = vmatpush1.bf16.msra.mxu0 %v2120
        %2791 = vmatprep.subr.bf16.mxu0 0
        %2792 = vmatpush1.bf16.msra.mxu0 %v2121
        %2793 = vmatprep.subr.bf16.mxu0 0
        %2794 = vmatpush1.bf16.msra.mxu0 %v2122
        %2795 = vmatprep.subr.bf16.mxu0 0
        %2796 = vmatpush1.bf16.msra.mxu0 %v2123
        %2797 = vmatprep.subr.bf16.mxu0 0
        %2798 = vmatpush1.bf16.msra.mxu0 %v2124
        %2799 = vmatprep.subr.bf16.mxu0 0
        %2800 = vmatpush1.bf16.msra.mxu0 %v2125
        %2801 = vmatprep.subr.bf16.mxu0 0
        %2802 = vmatpush1.bf16.msra.mxu0 %v2126
        %2803 = vmatprep.subr.bf16.mxu0 0
        %2804 = vmatpush1.bf16.msra.mxu0 %v2127
        %2805 = vmatprep.subr.bf16.mxu0 0
        %2806 = vmatpush1.bf16.msra.mxu0 %v2128
        %2807 = vmatprep.mubr.bf16.mxu0 %v942
        %2808 = vmatmul.mubr.bf16.gmra.mrb[0].mxu0 %v941
        %v2809 = vpop.f32.mrb[0].mxu0
        %v2810 = vadd.f32 %v2769, %v2809
        %v2811 = vpop.f32.mrb[0].mxu0
        %v2812 = vpop.f32.mrb[0].mxu0
        %v2813 = vadd.f32 %v2772, %v2812
        %v2814 = vpop.f32.mrb[0].mxu0
        %2815 = vdwg.mxu0
        %2816 = vmatprep.subr.bf16.mxu0 0
        %2817 = vmatpush1.bf16.msra.mxu0 %v2129
        %2818 = vmatprep.subr.bf16.mxu0 0
        %2819 = vmatpush1.bf16.msra.mxu0 %v2130
        %2820 = vmatprep.subr.bf16.mxu0 0
        %2821 = vmatpush1.bf16.msra.mxu0 %v2131
        %2822 = vmatprep.subr.bf16.mxu0 0
        %2823 = vmatpush1.bf16.msra.mxu0 %v2132
        %2824 = vmatprep.subr.bf16.mxu0 0
        %2825 = vmatpush1.bf16.msra.mxu0 %v2133
        %2826 = vmatprep.subr.bf16.mxu0 0
        %2827 = vmatpush1.bf16.msra.mxu0 %v2134
        %2828 = vmatprep.subr.bf16.mxu0 0
        %2829 = vmatpush1.bf16.msra.mxu0 %v2135
        %2830 = vmatprep.subr.bf16.mxu0 0
        %2831 = vmatpush1.bf16.msra.mxu0 %v2136
        %2832 = vmatprep.subr.bf16.mxu0 0
        %2833 = vmatpush1.bf16.msra.mxu0 %v2137
        %2834 = vmatprep.subr.bf16.mxu0 0
        %2835 = vmatpush1.bf16.msra.mxu0 %v2138
        %2836 = vmatprep.subr.bf16.mxu0 0
        %2837 = vmatpush1.bf16.msra.mxu0 %v2139
        %2838 = vmatprep.subr.bf16.mxu0 0
        %2839 = vmatpush1.bf16.msra.mxu0 %v2140
        %2840 = vmatprep.subr.bf16.mxu0 0
        %2841 = vmatpush1.bf16.msra.mxu0 %v2141
        %2842 = vmatprep.subr.bf16.mxu0 0
        %2843 = vmatpush1.bf16.msra.mxu0 %v2142
        %2844 = vmatprep.subr.bf16.mxu0 0
        %2845 = vmatpush1.bf16.msra.mxu0 %v2143
        %2846 = vmatprep.subr.bf16.mxu0 0
        %2847 = vmatpush1.bf16.msra.mxu0 %v2144
        %2848 = vmatprep.mubr.bf16.mxu0 %v944
        %2849 = vmatmul.mubr.bf16.gmra.mrb[0].mxu0 %v943
        %v2850 = vpop.f32.mrb[0].mxu0
        %v2851 = vadd.f32 %v2810, %v2850
        %v2852 = vpop.f32.mrb[0].mxu0
        %v2853 = vpop.f32.mrb[0].mxu0
        %v2854 = vadd.f32 %v2813, %v2853
        %v2855 = vpop.f32.mrb[0].mxu0
        %2856 = vdwg.mxu0
        %2857 = vmatprep.subr.bf16.mxu0 0
        %2858 = vmatpush1.bf16.msra.mxu0 %v2145
        %2859 = vmatprep.subr.bf16.mxu0 0
        %2860 = vmatpush1.bf16.msra.mxu0 %v2146
        %2861 = vmatprep.subr.bf16.mxu0 0
        %2862 = vmatpush1.bf16.msra.mxu0 %v2147
        %2863 = vmatprep.subr.bf16.mxu0 0
        %2864 = vmatpush1.bf16.msra.mxu0 %v2148
        %2865 = vmatprep.subr.bf16.mxu0 0
        %2866 = vmatpush1.bf16.msra.mxu0 %v2149
        %2867 = vmatprep.subr.bf16.mxu0 0
        %2868 = vmatpush1.bf16.msra.mxu0 %v2150
        %2869 = vmatprep.subr.bf16.mxu0 0
        %2870 = vmatpush1.bf16.msra.mxu0 %v2151
        %2871 = vmatprep.subr.bf16.mxu0 0
        %2872 = vmatpush1.bf16.msra.mxu0 %v2152
        %2873 = vmatprep.subr.bf16.mxu0 0
        %2874 = vmatpush1.bf16.msra.mxu0 %v2153
        %2875 = vmatprep.subr.bf16.mxu0 0
        %2876 = vmatpush1.bf16.msra.mxu0 %v2154
        %2877 = vmatprep.subr.bf16.mxu0 0
        %2878 = vmatpush1.bf16.msra.mxu0 %v2155
        %2879 = vmatprep.subr.bf16.mxu0 0
        %2880 = vmatpush1.bf16.msra.mxu0 %v2156
        %2881 = vmatprep.subr.bf16.mxu0 0
        %2882 = vmatpush1.bf16.msra.mxu0 %v2157
        %2883 = vmatprep.subr.bf16.mxu0 0
        %2884 = vmatpush1.bf16.msra.mxu0 %v2158
        %2885 = vmatprep.subr.bf16.mxu0 0
        %2886 = vmatpush1.bf16.msra.mxu0 %v2159
        %2887 = vmatprep.subr.bf16.mxu0 0
        %2888 = vmatpush1.bf16.msra.mxu0 %v2160
        %2889 = vmatprep.mubr.bf16.mxu0 %v946
        %2890 = vmatmul.mubr.bf16.gmra.mrb[0].mxu0 %v945
        %v2891 = vpop.f32.mrb[0].mxu0
        %v2892 = vadd.f32 %v2851, %v2891
        %v2893 = vpop.f32.mrb[0].mxu0
        %v2894 = vpop.f32.mrb[0].mxu0
        %v2895 = vadd.f32 %v2854, %v2894
        %v2896 = vpop.f32.mrb[0].mxu0
        %2897 = vdwg.mxu0
        %2898 = vmatprep.subr.bf16.mxu0 0
        %2899 = vmatpush1.bf16.msra.mxu0 %v2161
        %2900 = vmatprep.subr.bf16.mxu0 0
        %2901 = vmatpush1.bf16.msra.mxu0 %v2162
        %2902 = vmatprep.subr.bf16.mxu0 0
        %2903 = vmatpush1.bf16.msra.mxu0 %v2163
        %2904 = vmatprep.subr.bf16.mxu0 0
        %2905 = vmatpush1.bf16.msra.mxu0 %v2164
        %2906 = vmatprep.subr.bf16.mxu0 0
        %2907 = vmatpush1.bf16.msra.mxu0 %v2165
        %2908 = vmatprep.subr.bf16.mxu0 0
        %2909 = vmatpush1.bf16.msra.mxu0 %v2166
        %2910 = vmatprep.subr.bf16.mxu0 0
        %2911 = vmatpush1.bf16.msra.mxu0 %v2167
        %2912 = vmatprep.subr.bf16.mxu0 0
        %2913 = vmatpush1.bf16.msra.mxu0 %v2168
        %2914 = vmatprep.subr.bf16.mxu0 0
        %2915 = vmatpush1.bf16.msra.mxu0 %v2169
        %2916 = vmatprep.subr.bf16.mxu0 0
        %2917 = vmatpush1.bf16.msra.mxu0 %v2170
        %2918 = vmatprep.subr.bf16.mxu0 0
        %2919 = vmatpush1.bf16.msra.mxu0 %v2171
        %2920 = vmatprep.subr.bf16.mxu0 0
        %2921 = vmatpush1.bf16.msra.mxu0 %v2172
        %2922 = vmatprep.subr.bf16.mxu0 0
        %2923 = vmatpush1.bf16.msra.mxu0 %v2173
        %2924 = vmatprep.subr.bf16.mxu0 0
        %2925 = vmatpush1.bf16.msra.mxu0 %v2174
        %2926 = vmatprep.subr.bf16.mxu0 0
        %2927 = vmatpush1.bf16.msra.mxu0 %v2175
        %2928 = vmatprep.subr.bf16.mxu0 0
        %2929 = vmatpush1.bf16.msra.mxu0 %v2176
        %2930 = vmatprep.mubr.bf16.mxu0 %v948
        %2931 = vmatmul.mubr.bf16.gmra.mrb[0].mxu0 %v947
        %v2932 = vpop.f32.mrb[0].mxu0
        %v2933 = vadd.f32 %v2892, %v2932
        %v2934 = vpop.f32.mrb[0].mxu0
        %v2935 = vpop.f32.mrb[0].mxu0
        %v2936 = vadd.f32 %v2895, %v2935
        %v2937 = vpop.f32.mrb[0].mxu0
        %2938 = vdwg.mxu0
        %2939 = vmatprep.subr.bf16.mxu0 0
        %2940 = vmatpush1.bf16.msra.mxu0 %v2177
        %2941 = vmatprep.subr.bf16.mxu0 0
        %2942 = vmatpush1.bf16.msra.mxu0 %v2178
        %2943 = vmatprep.subr.bf16.mxu0 0
        %2944 = vmatpush1.bf16.msra.mxu0 %v2179
        %2945 = vmatprep.subr.bf16.mxu0 0
        %2946 = vmatpush1.bf16.msra.mxu0 %v2180
        %2947 = vmatprep.subr.bf16.mxu0 0
        %2948 = vmatpush1.bf16.msra.mxu0 %v2181
        %2949 = vmatprep.subr.bf16.mxu0 0
        %2950 = vmatpush1.bf16.msra.mxu0 %v2182
        %2951 = vmatprep.subr.bf16.mxu0 0
        %2952 = vmatpush1.bf16.msra.mxu0 %v2183
        %2953 = vmatprep.subr.bf16.mxu0 0
        %2954 = vmatpush1.bf16.msra.mxu0 %v2184
        %2955 = vmatprep.subr.bf16.mxu0 0
        %2956 = vmatpush1.bf16.msra.mxu0 %v2185
        %2957 = vmatprep.subr.bf16.mxu0 0
        %2958 = vmatpush1.bf16.msra.mxu0 %v2186
        %2959 = vmatprep.subr.bf16.mxu0 0
        %2960 = vmatpush1.bf16.msra.mxu0 %v2187
        %2961 = vmatprep.subr.bf16.mxu0 0
        %2962 = vmatpush1.bf16.msra.mxu0 %v2188
        %2963 = vmatprep.subr.bf16.mxu0 0
        %2964 = vmatpush1.bf16.msra.mxu0 %v2189
        %2965 = vmatprep.subr.bf16.mxu0 0
        %2966 = vmatpush1.bf16.msra.mxu0 %v2190
        %2967 = vmatprep.subr.bf16.mxu0 0
        %2968 = vmatpush1.bf16.msra.mxu0 %v2191
        %2969 = vmatprep.subr.bf16.mxu0 0
        %2970 = vmatpush1.bf16.msra.mxu0 %v2192
        %2971 = vmatprep.mubr.bf16.mxu0 %v950
        %2972 = vmatmul.mubr.bf16.gmra.mrb[0].mxu0 %v949
        %v2973 = vpop.f32.mrb[0].mxu0
        %v2974 = vadd.f32 %v2933, %v2973
        %v2975 = vpop.f32.mrb[0].mxu0
        %v2976 = vpop.f32.mrb[0].mxu0
        %v2977 = vadd.f32 %v2936, %v2976
        %v2978 = vpop.f32.mrb[0].mxu0
        %2979 = vdwg.mxu0
        %2980 = vmatprep.subr.bf16.mxu0 0
        %2981 = vmatpush1.bf16.msra.mxu0 %v2193
        %2982 = vmatprep.subr.bf16.mxu0 0
        %2983 = vmatpush1.bf16.msra.mxu0 %v2194
        %2984 = vmatprep.subr.bf16.mxu0 0
        %2985 = vmatpush1.bf16.msra.mxu0 %v2195
        %2986 = vmatprep.subr.bf16.mxu0 0
        %2987 = vmatpush1.bf16.msra.mxu0 %v2196
        %2988 = vmatprep.subr.bf16.mxu0 0
        %2989 = vmatpush1.bf16.msra.mxu0 %v2197
        %2990 = vmatprep.subr.bf16.mxu0 0
        %2991 = vmatpush1.bf16.msra.mxu0 %v2198
        %2992 = vmatprep.subr.bf16.mxu0 0
        %2993 = vmatpush1.bf16.msra.mxu0 %v2199
        %2994 = vmatprep.subr.bf16.mxu0 0
        %2995 = vmatpush1.bf16.msra.mxu0 %v2200
        %2996 = vmatprep.subr.bf16.mxu0 0
        %2997 = vmatpush1.bf16.msra.mxu0 %v2201
        %2998 = vmatprep.subr.bf16.mxu0 0
        %2999 = vmatpush1.bf16.msra.mxu0 %v2202
        %3000 = vmatprep.subr.bf16.mxu0 0
        %3001 = vmatpush1.bf16.msra.mxu0 %v2203
        %3002 = vmatprep.subr.bf16.mxu0 0
        %3003 = vmatpush1.bf16.msra.mxu0 %v2204
        %3004 = vmatprep.subr.bf16.mxu0 0
        %3005 = vmatpush1.bf16.msra.mxu0 %v2205
        %3006 = vmatprep.subr.bf16.mxu0 0
        %3007 = vmatpush1.bf16.msra.mxu0 %v2206
        %3008 = vmatprep.subr.bf16.mxu0 0
        %3009 = vmatpush1.bf16.msra.mxu0 %v2207
        %3010 = vmatprep.subr.bf16.mxu0 0
        %3011 = vmatpush1.bf16.msra.mxu0 %v2208
        %3012 = vmatprep.mubr.bf16.mxu0 %v952
        %3013 = vmatmul.mubr.bf16.gmra.mrb[0].mxu0 %v951
        %v3014 = vpop.f32.mrb[0].mxu0
        %v3015 = vadd.f32 %v2974, %v3014
        %v3016 = vpop.f32.mrb[0].mxu0
        %v3017 = vpop.f32.mrb[0].mxu0
        %v3018 = vadd.f32 %v2977, %v3017
        %v3019 = vpop.f32.mrb[0].mxu0
        %3020 = vdwg.mxu0
        %3021 = vmatprep.subr.bf16.mxu0 0
        %3022 = vmatpush1.bf16.msra.mxu0 %v2209
        %3023 = vmatprep.subr.bf16.mxu0 0
        %3024 = vmatpush1.bf16.msra.mxu0 %v2210
        %3025 = vmatprep.subr.bf16.mxu0 0
        %3026 = vmatpush1.bf16.msra.mxu0 %v2211
        %3027 = vmatprep.subr.bf16.mxu0 0
        %3028 = vmatpush1.bf16.msra.mxu0 %v2212
        %3029 = vmatprep.subr.bf16.mxu0 0
        %3030 = vmatpush1.bf16.msra.mxu0 %v2213
        %3031 = vmatprep.subr.bf16.mxu0 0
        %3032 = vmatpush1.bf16.msra.mxu0 %v2214
        %3033 = vmatprep.subr.bf16.mxu0 0
        %3034 = vmatpush1.bf16.msra.mxu0 %v2215
        %3035 = vmatprep.subr.bf16.mxu0 0
        %3036 = vmatpush1.bf16.msra.mxu0 %v2216
        %3037 = vmatprep.subr.bf16.mxu0 0
        %3038 = vmatpush1.bf16.msra.mxu0 %v2217
        %3039 = vmatprep.subr.bf16.mxu0 0
        %3040 = vmatpush1.bf16.msra.mxu0 %v2218
        %3041 = vmatprep.subr.bf16.mxu0 0
        %3042 = vmatpush1.bf16.msra.mxu0 %v2219
        %3043 = vmatprep.subr.bf16.mxu0 0
        %3044 = vmatpush1.bf16.msra.mxu0 %v2220
        %3045 = vmatprep.subr.bf16.mxu0 0
        %3046 = vmatpush1.bf16.msra.mxu0 %v2221
        %3047 = vmatprep.subr.bf16.mxu0 0
        %3048 = vmatpush1.bf16.msra.mxu0 %v2222
        %3049 = vmatprep.subr.bf16.mxu0 0
        %3050 = vmatpush1.bf16.msra.mxu0 %v2223
        %3051 = vmatprep.subr.bf16.mxu0 0
        %3052 = vmatpush1.bf16.msra.mxu0 %v2224
        %3053 = vmatprep.mubr.bf16.mxu0 %v954
        %3054 = vmatmul.mubr.bf16.gmra.mrb[0].mxu0 %v953
        %v3055 = vpop.f32.mrb[0].mxu0
        %v3056 = vadd.f32 %v3015, %v3055
        %v3057 = vpop.f32.mrb[0].mxu0
        %v3058 = vpop.f32.mrb[0].mxu0
        %v3059 = vadd.f32 %v3018, %v3058
        %v3060 = vpop.f32.mrb[0].mxu0
        %3061 = vdwg.mxu0
        %3062 = vmatprep.subr.bf16.mxu0 0
        %3063 = vmatpush1.bf16.msra.mxu0 %v2225
        %3064 = vmatprep.subr.bf16.mxu0 0
        %3065 = vmatpush1.bf16.msra.mxu0 %v2226
        %3066 = vmatprep.subr.bf16.mxu0 0
        %3067 = vmatpush1.bf16.msra.mxu0 %v2227
        %3068 = vmatprep.subr.bf16.mxu0 0
        %3069 = vmatpush1.bf16.msra.mxu0 %v2228
        %3070 = vmatprep.subr.bf16.mxu0 0
        %3071 = vmatpush1.bf16.msra.mxu0 %v2229
        %3072 = vmatprep.subr.bf16.mxu0 0
        %3073 = vmatpush1.bf16.msra.mxu0 %v2230
        %3074 = vmatprep.subr.bf16.mxu0 0
        %3075 = vmatpush1.bf16.msra.mxu0 %v2231
        %3076 = vmatprep.subr.bf16.mxu0 0
        %3077 = vmatpush1.bf16.msra.mxu0 %v2232
        %3078 = vmatprep.subr.bf16.mxu0 0
        %3079 = vmatpush1.bf16.msra.mxu0 %v2233
        %3080 = vmatprep.subr.bf16.mxu0 0
        %3081 = vmatpush1.bf16.msra.mxu0 %v2234
        %3082 = vmatprep.subr.bf16.mxu0 0
        %3083 = vmatpush1.bf16.msra.mxu0 %v2235
        %3084 = vmatprep.subr.bf16.mxu0 0
        %3085 = vmatpush1.bf16.msra.mxu0 %v2236
        %3086 = vmatprep.subr.bf16.mxu0 0
        %3087 = vmatpush1.bf16.msra.mxu0 %v2237
        %3088 = vmatprep.subr.bf16.mxu0 0
        %3089 = vmatpush1.bf16.msra.mxu0 %v2238
        %3090 = vmatprep.subr.bf16.mxu0 0
        %3091 = vmatpush1.bf16.msra.mxu0 %v2239
        %3092 = vmatprep.subr.bf16.mxu0 0
        %3093 = vmatpush1.bf16.msra.mxu0 %v2240
        %3094 = vmatprep.mubr.bf16.mxu0 %v956
        %3095 = vmatmul.mubr.bf16.gmra.mrb[0].mxu0 %v955
        %v3096 = vpop.f32.mrb[0].mxu0
        %v3097 = vadd.f32 %v3056, %v3096
        %v3098 = vpop.f32.mrb[0].mxu0
        %v3099 = vpop.f32.mrb[0].mxu0
        %v3100 = vadd.f32 %v3059, %v3099
        %v3101 = vpop.f32.mrb[0].mxu0
        %3102 = vdwg.mxu0
        %3103 = vmatprep.subr.bf16.mxu0 0
        %3104 = vmatpush1.bf16.msra.mxu0 %v2241
        %3105 = vmatprep.subr.bf16.mxu0 0
        %3106 = vmatpush1.bf16.msra.mxu0 %v2242
        %3107 = vmatprep.subr.bf16.mxu0 0
        %3108 = vmatpush1.bf16.msra.mxu0 %v2243
        %3109 = vmatprep.subr.bf16.mxu0 0
        %3110 = vmatpush1.bf16.msra.mxu0 %v2244
        %3111 = vmatprep.subr.bf16.mxu0 0
        %3112 = vmatpush1.bf16.msra.mxu0 %v2245
        %3113 = vmatprep.subr.bf16.mxu0 0
        %3114 = vmatpush1.bf16.msra.mxu0 %v2246
        %3115 = vmatprep.subr.bf16.mxu0 0
        %3116 = vmatpush1.bf16.msra.mxu0 %v2247
        %3117 = vmatprep.subr.bf16.mxu0 0
        %3118 = vmatpush1.bf16.msra.mxu0 %v2248
        %3119 = vmatprep.subr.bf16.mxu0 0
        %3120 = vmatpush1.bf16.msra.mxu0 %v2249
        %3121 = vmatprep.subr.bf16.mxu0 0
        %3122 = vmatpush1.bf16.msra.mxu0 %v2250
        %3123 = vmatprep.subr.bf16.mxu0 0
        %3124 = vmatpush1.bf16.msra.mxu0 %v2251
        %3125 = vmatprep.subr.bf16.mxu0 0
        %3126 = vmatpush1.bf16.msra.mxu0 %v2252
        %3127 = vmatprep.subr.bf16.mxu0 0
        %3128 = vmatpush1.bf16.msra.mxu0 %v2253
        %3129 = vmatprep.subr.bf16.mxu0 0
        %3130 = vmatpush1.bf16.msra.mxu0 %v2254
        %3131 = vmatprep.subr.bf16.mxu0 0
        %3132 = vmatpush1.bf16.msra.mxu0 %v2255
        %3133 = vmatprep.subr.bf16.mxu0 0
        %3134 = vmatpush1.bf16.msra.mxu0 %v2256
        %3135 = vmatprep.mubr.bf16.mxu0 %v958
        %3136 = vmatmul.mubr.bf16.gmra.mrb[0].mxu0 %v957
        %v3137 = vpop.f32.mrb[0].mxu0
        %v3138 = vadd.f32 %v3097, %v3137
        %v3139 = vpop.f32.mrb[0].mxu0
        %v3140 = vpop.f32.mrb[0].mxu0
        %v3141 = vadd.f32 %v3100, %v3140
        %v3142 = vpop.f32.mrb[0].mxu0
        %3143 = vdwg.mxu0
        %3144 = vmatprep.subr.bf16.mxu0 0
        %3145 = vmatpush1.bf16.msra.mxu0 %v2257
        %3146 = vmatprep.subr.bf16.mxu0 0
        %3147 = vmatpush1.bf16.msra.mxu0 %v2258
        %3148 = vmatprep.subr.bf16.mxu0 0
        %3149 = vmatpush1.bf16.msra.mxu0 %v2259
        %3150 = vmatprep.subr.bf16.mxu0 0
        %3151 = vmatpush1.bf16.msra.mxu0 %v2260
        %3152 = vmatprep.subr.bf16.mxu0 0
        %3153 = vmatpush1.bf16.msra.mxu0 %v2261
        %3154 = vmatprep.subr.bf16.mxu0 0
        %3155 = vmatpush1.bf16.msra.mxu0 %v2262
        %3156 = vmatprep.subr.bf16.mxu0 0
        %3157 = vmatpush1.bf16.msra.mxu0 %v2263
        %3158 = vmatprep.subr.bf16.mxu0 0
        %3159 = vmatpush1.bf16.msra.mxu0 %v2264
        %3160 = vmatprep.subr.bf16.mxu0 0
        %3161 = vmatpush1.bf16.msra.mxu0 %v2265
        %3162 = vmatprep.subr.bf16.mxu0 0
        %3163 = vmatpush1.bf16.msra.mxu0 %v2266
        %3164 = vmatprep.subr.bf16.mxu0 0
        %3165 = vmatpush1.bf16.msra.mxu0 %v2267
        %3166 = vmatprep.subr.bf16.mxu0 0
        %3167 = vmatpush1.bf16.msra.mxu0 %v2268
        %3168 = vmatprep.subr.bf16.mxu0 0
        %3169 = vmatpush1.bf16.msra.mxu0 %v2269
        %3170 = vmatprep.subr.bf16.mxu0 0
        %3171 = vmatpush1.bf16.msra.mxu0 %v2270
        %3172 = vmatprep.subr.bf16.mxu0 0
        %3173 = vmatpush1.bf16.msra.mxu0 %v2271
        %3174 = vmatprep.subr.bf16.mxu0 0
        %3175 = vmatpush1.bf16.msra.mxu0 %v2272
        %3176 = vmatprep.mubr.bf16.mxu0 %v960
        %3177 = vmatmul.mubr.bf16.gmra.mrb[0].mxu0 %v959
        %v3178 = vpop.f32.mrb[0].mxu0
        %v3179 = vadd.f32 %v3138, %v3178
        %v3180 = vpop.f32.mrb[0].mxu0
        %v3181 = vpop.f32.mrb[0].mxu0
        %v3182 = vadd.f32 %v3141, %v3181
        %v3183 = vpop.f32.mrb[0].mxu0
        %3184 = vdwg.mxu0
        %3185 = vst [vmem:[%s278] sm:$0xff] %v3179
        %3186 = vst [vmem:[%s278 + $0x8] sm:$0xff] %v3182
        %s3187 = sand.u32 %s125, 1
        %s3188 = scalar_lea.sflag [#allocation4], %s3187
        %s3189 = sand.u32 %s125, 1
        %s3190 = smul.addr %s3189, 16
        %s3191 = scalar_lea.vmem [#allocation8], %s3190
        // Predicated region
        $region45: #{tpu_custom_call.1} parent=31 // pred_check
          %p3192 = pneg %p135
        $region46: #{tpu_custom_call.1} parent=31 // pred_check_branch
          %3194 = sbr.rel (%p3192) target = $region48
        $region47: #{tpu_custom_call.1} parent=31 // pred_region
          %s3195 = smul.u32 2, %s28
          %s3197 = ssub.s32 256, 256
          %3198 = vsyncadd %s3188, %s3197
          %s3199 = smul.addr %s27, 2
          %s3200 = sadd.s32 %s3195, %s3199
          %s3201 = smul.addr %s3200, 128
          %s3202 = scalar_lea.hbm %s3, %s3201
          %s3203 = sshll.u32 %s3191, 4
          %s3204 = int_to_ptr.vmem [resolvable:$true] %s3203
          %3209 = dma.vmem_to_hbm [thread:$0]  %s3204, 256, %s3202, %s3188, 128, 128, 8
        $region48: #{tpu_custom_call.1} parent=31 // pred_fallthru
          _
      $region32: #{tpu_custom_call.1} parent=5 // pred_fallthru
        _
      %p3210 = scmp.le.s32.totalorder 2, %s18
      // Predicated region
      $region49: #{tpu_custom_call.1} parent=5 // pred_check
        %p3211 = pneg %p3210
      $region50: #{tpu_custom_call.1} parent=5 // pred_check_branch
        %3213 = sbr.rel (%p3211) target = $region52
      $region51: #{tpu_custom_call.1} parent=5 // pred_region
        %s3214 = ssub.s32 %s18, 2
        // Predicated region
        $region53: #{tpu_custom_call.1} parent=51 // pred_check
          %p3215 = pneg %p141
        $region54: #{tpu_custom_call.1} parent=51 // pred_check_branch
          %3217 = sbr.rel (%p3215) target = $region56
        $region55: #{tpu_custom_call.1} parent=51 // pred_region
          %s3218 = sand.u32 %s126, 1
          %s3219 = scalar_lea.sflag [#allocation4], %s3218
          %s3220 = sand.u32 %s126, 1
          %s3221 = smul.addr %s3220, 16
          %s3222 = scalar_lea.vmem [#allocation8], %s3221
          %3223 = dma.done %s3219, 256
        $region56: #{tpu_custom_call.1} parent=51 // pred_fallthru
          _
      $region52: #{tpu_custom_call.1} parent=5 // pred_fallthru
        _
    $region6: #{tpu_custom_call.1} parent=1 // loop_footer
      %s22 = sadd.s32 1, %s18
    $region7: #{tpu_custom_call.1} parent=1 // loop_footer_branch
      %17 = sbr.rel target = $region3
    $region8: #{tpu_custom_call.1} parent=1 // loop_exit
      _
    %3224 = vsyncpa [#allocation3], 1
    %s3225 = scalar_lea.sflag [#allocation3], 1
    %3226 = vsyncpa %s3225, 1
    %3227 = vsyncpa [#allocation6], 1
    %s3228 = scalar_lea.sflag [#allocation6], 1
    %3229 = vsyncpa %s3228, 1
    %3230 = vsyncpa [#allocation4], 1
    %s3231 = scalar_lea.sflag [#allocation4], 1
    %3232 = vsyncpa %s3231, 1

</llo_original>
